<compile_context>
chip_gen: v7x
topology: tpu7x:2x2x1
jax: 0.10.0
libtpu: 0.0.40
codegen_flags: <defaults>
</compile_context>

<pallas_src>
import functools
import math

import numpy as np
import jax
import jax.numpy as jnp
from jax.experimental import pallas as pl
from jax.experimental.pallas import tpu as pltpu

GMM_COMP = 5                      # mixture components
GMM_PARAM = 6                     # pi, u_x, u_y, sigma_x, sigma_y, rho
GMM_DIM = GMM_COMP * GMM_PARAM    # 30
AUG = 64                          # aug_size in the reference module
LANE = 128                        # TPU lane width

# packed output slab lane layout
L_XY = 60                         # sample_xy at lanes 60,61
L_WH = 62                         # sample_wh at lanes 62,63
L_PDF = 64                        # xy_pdf at lane 64
# xy_gmm occupies lanes [0,30), wh_gmm lanes [30,60)

# bf16 weight-slab row offsets (sublane-packed, lane width 128)
R_WBE = 0          # box_embedding           (4,64)  in an (8,128) block
R_A = 8            # folded  w_ds @ w_od     (128,128)
R_OT = 136         # output_Layer enc part   (128,128)
R_OG = 264         # output_Layer gf part    (128,128)
R_BM = 392         # folded  w_do @ w_od     (64,128) in a (128,128) block
R_OB = 520         # output_Layer obe part   (64,128) in a (128,128) block
R_PXY = 648        # 0/1 placement xy_gmm -> packed lanes [0,30)     (32,128)
R_PWH = 680        # 0/1 placement wh_gmm -> packed lanes [30,60)    (32,128)
W_ROWS = 712


# ----------------------------------------------------------------------------
# in-kernel GMM helpers (operate on (N, 128) lane-aligned parameter groups)
# ----------------------------------------------------------------------------
def _softmax_greedy(pi_raw, u_a, u_b, valid, lane):
    """Masked softmax over the first GMM_COMP lanes + greedy (argmax) pick.

    Temperature adjustment in the reference is monotonic per row, so argmax is
    unchanged; this is the module's own fallback for torch.multinomial.
    """
    logits = jnp.where(valid, pi_raw, -1e30)            # mask before exp (no overflow)
    m = jnp.max(logits, axis=1, keepdims=True)
    e = jnp.exp(logits - m)                              # padded lanes -> exp(-huge) = 0
    pi = e * pl.reciprocal(jnp.sum(e, axis=1, keepdims=True), approx=True)
    pmax = jnp.max(pi, axis=1, keepdims=True)
    idx = jnp.min(jnp.where(pi >= pmax, lane, LANE), axis=1, keepdims=True)
    onehot = (lane == idx).astype(jnp.float32)
    a_sel = jnp.sum(u_a * onehot, axis=1, keepdims=True)
    b_sel = jnp.sum(u_b * onehot, axis=1, keepdims=True)
    return pi, a_sel, b_sel


def _gmm_pdf(pi, u_x, u_y, ls_x, ls_y, rho_raw, x_sel, y_sel, valid):
    """Sketch-RNN / Obj-GAN mixture pdf evaluated at the sampled point."""
    inv_sx = jnp.exp(-ls_x)                              # 1/sigma via EUP, no divide
    inv_sy = jnp.exp(-ls_y)
    rho = jnp.clip(jnp.tanh(rho_raw), -0.95, 0.95)
    dx = x_sel - u_x
    dy = y_sel - u_y
    z = (dx * inv_sx) ** 2 + (dy * inv_sy) ** 2 - 2.0 * rho * (dx * dy * inv_sx * inv_sy)
    one_m_r2 = 1.0 - rho * rho
    a = -0.5 * z / one_m_r2                              # exact division (feeds a loss)
    norm = jnp.maximum(2.0 * math.pi * jnp.exp(ls_x + ls_y) * jnp.sqrt(one_m_r2), 1e-5)
    terms = pi * jnp.exp(a) / norm
    return jnp.sum(jnp.where(valid, terms, 0.0), axis=1, keepdims=True)


# ----------------------------------------------------------------------------
# the fused kernel
# ----------------------------------------------------------------------------
def _pdf_decoder_kernel(gp_ref, is0_ref, rbc_ref, box_ref, enc_ref, gf_ref,
                        w_ref, g_ref, s_ref, f_ref, gb_ref,
                        bpi_ref, pack_ref):
    f32 = jnp.float32
    bf16 = jnp.bfloat16
    dot = functools.partial(jnp.dot, preferred_element_type=f32)
    nr = enc_ref.shape[0]

    # --- carve the packed weight slabs (static, sublane-aligned views) ---
    w_be = w_ref[R_WBE:R_WBE + 8, :]                     # bf16; rows>=4 / lanes>=64 zero
    w_a = w_ref[R_A:R_A + LANE, :]                       # folded w_ds @ w_od
    w_ot = w_ref[R_OT:R_OT + LANE, :]
    w_og = w_ref[R_OG:R_OG + LANE, :]
    w_bm = w_ref[R_BM:R_BM + LANE, :]                    # folded w_do @ w_od (rows>=64 zero)
    w_ob = w_ref[R_OB:R_OB + LANE, :]                    # rows>=64 zero
    p_xy = w_ref[R_PXY:R_PXY + 32, :].astype(f32)        # exact 0/1 placement matrices
    p_wh = w_ref[R_PWH:R_PWH + 32, :].astype(f32)

    w_xy = g_ref[0:LANE, :]                              # (128,32) bf16, cols [0,30) real
    w_whx = g_ref[LANE:2 * LANE, :]
    w_whe = g_ref[2 * LANE:3 * LANE, :]                  # rows>=64 zero

    s_xy = s_ref[0:32, :].astype(f32)                    # 0/1 scatter: col 5g+k -> tile g lane k
    s_wh = s_ref[32:64, :].astype(f32)

    b_be = f_ref[0:1, :]
    c_dec = f_ref[1:2, :]                                # folded b_d @ w_od
    b_o = f_ref[2:3, :]
    b_xe = f_ref[3:4, :]
    w_xe0 = f_ref[4:5, :]                                # xy_embedding kept f32 (VPU path)
    w_xe1 = f_ref[5:6, :]
    b_xy = gb_ref[0:1, :]                                # (1,32) f32
    b_wh = gb_ref[1:2, :]

    # --- box embedding: |box| gathered to the step each row consumes (one-hot gp
    #     folds the train-path strided copy and the obe[s-1] shift) ---
    abox = dot(gp_ref[...], jnp.abs(box_ref[...]))                          # (nr,8)
    obe = dot(abox.astype(bf16), w_be) + b_be                               # (nr,128)
    enc16 = enc_ref[...].astype(bf16)
    obe16 = obe.astype(bf16)

    # --- decoder stand-in folded into output_Layer (host-side fold) ---
    # TODO(synk): CustomTransformerDecoder is not defined in the provided source; the
    # stand-in is a single linear layer (so the fold is exact) and src/trg attention
    # masks are unused.  Remove the fold when the real decoder lands.
    out_dec = dot(enc16, w_a) + dot(obe16, w_bm) + c_dec
    out_row0 = dot(enc16, w_ot) + dot(obe16, w_ob)
    # per-batch global-feature broadcast via a tiny one-hot (K=B) matmul
    gf_rows = dot(rbc_ref[...], gf_ref[...])                                # (nr,128)
    bpi = (jnp.where(is0_ref[...] > 0.5, out_row0, out_dec)
           + dot(gf_rows.astype(bf16), w_og) + b_o)
    bpi_ref[...] = bpi
    bpi16 = bpi.astype(bf16)

    lane = jax.lax.broadcasted_iota(jnp.int32, (nr, LANE), 1)
    valid = lane < GMM_COMP

    # --- GMM head, xy branch: dense (nr,32) params once, then a cheap exact 0/1
    #     scatter to 128-lane-aligned parameter groups (no zero-padded weights) ---
    gxy = dot(bpi16, w_xy) + b_xy                                           # (nr,32)
    sp = dot(gxy, s_xy)                                                     # (nr,768)
    pi_xy, x_sel, y_sel = _softmax_greedy(sp[:, 0:LANE], sp[:, LANE:2 * LANE],
                                          sp[:, 2 * LANE:3 * LANE], valid, lane)
    pdf = _gmm_pdf(pi_xy, sp[:, LANE:2 * LANE], sp[:, 2 * LANE:3 * LANE],
                   sp[:, 3 * LANE:4 * LANE], sp[:, 4 * LANE:5 * LANE],
                   sp[:, 5 * LANE:6 * LANE], x_sel, y_sel, valid)

    # --- xy embedding (2 -> 64) as a VPU outer product; dropout = identity (eval) ---
    xe = x_sel * w_xe0 + y_sel * w_xe1 + b_xe                               # (nr,128)

    # --- GMM head, wh branch (greedy sample needs pi / u_w / u_h groups only) ---
    gwh = dot(bpi16, w_whx) + dot(xe.astype(bf16), w_whe) + b_wh            # (nr,32)
    sw = dot(gwh, s_wh)                                                     # (nr,768)
    _, w_sel, h_sel = _softmax_greedy(sw[:, 0:LANE], sw[:, LANE:2 * LANE],
                                      sw[:, 2 * LANE:3 * LANE], valid, lane)

    # --- single lane-dense packed output slab (one unmasked store) ---
    pk = dot(gxy, p_xy) + dot(gwh, p_wh)          # xy_gmm @ [0,30), wh_gmm @ [30,60)
    pk = jnp.where(lane == L_XY, x_sel, pk)
    pk = jnp.where(lane == L_XY + 1, y_sel, pk)
    pk = jnp.where(lane == L_WH, w_sel, pk)
    pk = jnp.where(lane == L_WH + 1, h_sel, pk)
    pk = jnp.where(lane == L_PDF, pdf, pk)
    pack_ref[...] = pk


# ----------------------------------------------------------------------------
# host-side (once, outside jit): weight folding / bf16 quantisation + slab packing
# ----------------------------------------------------------------------------
def _fold_quantize(params, H):
    f = lambda a: np.asarray(a, np.float32)
    w_be, b_be = [f(a) for a in params["box_embedding"]]
    w_d, b_d = [f(a) for a in params["decoder_standin"]]
    w_o, b_o = [f(a) for a in params["output_layer"]]
    w_xy, b_xy = [f(a) for a in params["xy_bivariate"]]
    w_xe, b_xe = [f(a) for a in params["xy_embedding"]]
    w_wh, b_wh = [f(a) for a in params["wh_bivariate"]]

    w_od = w_o[:H + AUG, :]
    Q = dict(w_be=w_be, b_be=b_be,
             A=w_d[:H, :] @ w_od, Bm=w_d[H:, :] @ w_od, c_dec=b_d[None, :] @ w_od,
             w_ot=w_o[:H, :], w_ob=w_o[H:H + AUG, :], w_og=w_o[H + AUG:, :], b_o=b_o,
             w_xy=w_xy, b_xy=b_xy, w_xe=w_xe, b_xe=b_xe,
             w_whx=w_wh[:H, :], w_whe=w_wh[H:, :], b_wh=b_wh)

    # sanity: the fold must reproduce the two-step stub decoder + output_Layer
    rng = np.random.RandomState(0)
    pe = rng.randn(4, H).astype(np.float32)
    po = rng.randn(4, AUG).astype(np.float32)
    two = (np.concatenate([pe, po], 1) @ w_d + b_d) @ w_od
    fold = pe @ Q["A"] + po @ Q["Bm"] + Q["c_dec"]
    np.testing.assert_allclose(fold, two, rtol=1e-4, atol=1e-4)
    return Q


def _build_prep(Q, B, S, H):
    assert H == LANE and AUG == 64, "slab layout assumes hidden=128, aug=64"
    T = S - 1
    NS = B * S
    NTP = -(-(B * T) // 8) * 8                           # box rows padded to sublane mult.

    # per-row one-hot constants: strided box copy + obe[s-1] shift (gp),
    # s==0 selector (is0), per-batch global-feature broadcast (rbc)
    src_fix = list(range(T))
    for t in range(2, T, 2):                             # obc[:, 2::2] = obc[:, 1::2]
        src_fix[t] = t - 1
    gp = np.zeros((NS, NTP), np.float32)
    is0 = np.zeros((NS, 1), np.float32)
    rbc = np.zeros((NS, B), np.float32)
    for n in range(NS):
        b, s = divmod(n, S)
        gp[n, b * T + src_fix[max(s - 1, 0)]] = 1.0
        is0[n, 0] = 1.0 if s == 0 else 0.0
        rbc[n, b] = 1.0

    # bf16 weight slab (sublane-packed, lane width 128)
    W = np.zeros((W_ROWS, LANE), np.float32)
    W[R_WBE:R_WBE + 4, :AUG] = Q["w_be"]
    W[R_A:R_A + LANE, :] = Q["A"]
    W[R_OT:R_OT + LANE, :] = Q["w_ot"]
    W[R_OG:R_OG + LANE, :] = Q["w_og"]
    W[R_BM:R_BM + AUG, :] = Q["Bm"]
    W[R_OB:R_OB + AUG, :] = Q["w_ob"]
    for j in range(GMM_DIM):                             # exact 0/1 placement matrices
        W[R_PXY + j, j] = 1.0
        W[R_PWH + j, GMM_DIM + j] = 1.0

    # bf16 dense GMM weights (lane width 32, cols [0,30) real)
    G = np.zeros((3 * LANE, 32), np.float32)
    G[0:LANE, :GMM_DIM] = Q["w_xy"]
    G[LANE:2 * LANE, :GMM_DIM] = Q["w_whx"]
    G[2 * LANE:2 * LANE + AUG, :GMM_DIM] = Q["w_whe"]

    # exact 0/1 scatter: dense col 5g+k -> group tile g, lane k
    SC = np.zeros((64, GMM_PARAM * LANE), np.float32)
    for g in range(GMM_PARAM):
        for k in range(GMM_COMP):
            SC[g * GMM_COMP + k, g * LANE + k] = 1.0
    for g in range(3):                                   # wh: pi / u_w / u_h only
        for k in range(GMM_COMP):
            SC[32 + g * GMM_COMP + k, g * LANE + k] = 1.0

    # f32 bias / VPU-constant slab
    F = np.zeros((8, LANE), np.float32)
    F[0, :AUG] = Q["b_be"]
    F[1, :] = Q["c_dec"][0]
    F[2, :] = Q["b_o"]
    F[3, :AUG] = Q["b_xe"]
    F[4, :AUG] = Q["w_xe"][0]
    F[5, :AUG] = Q["w_xe"][1]
    GB = np.zeros((8, 32), np.float32)
    GB[0, :GMM_DIM] = Q["b_xy"]
    GB[1, :GMM_DIM] = Q["b_wh"]

    return dict(gp=jnp.asarray(gp), is0=jnp.asarray(is0), rbc=jnp.asarray(rbc),
                wslab=jnp.asarray(W, jnp.bfloat16), gslab=jnp.asarray(G, jnp.bfloat16),
                sslab=jnp.asarray(SC, jnp.bfloat16), fslab=jnp.asarray(F),
                gbias=jnp.asarray(GB))


# ----------------------------------------------------------------------------
# forward wrapper (single pallas_call; row dimension is a 'parallel' grid axis)
# ----------------------------------------------------------------------------
def pdf_decoder_forward(output_box, output_context, encoder_output, global_mask,
                        prep, is_train=True):
    B, S, H = encoder_output.shape
    T = S - 1
    NS = B * S
    NTP = prep["gp"].shape[1]
    box_dim = output_box.shape[-1]

    enc_rows = encoder_output.astype(jnp.float32).reshape(NS, H)
    gf_src = encoder_output if is_train else output_context
    # masked global max (finite fill; an all-masked / zero-length row poisons bpi
    # exactly as the reference module's -inf fill does)
    gf = jnp.max(jnp.where(global_mask[..., None], gf_src, -1e30),
                 axis=1).astype(jnp.float32)                                 # (B,H)
    box_pad = jnp.zeros((NTP, 8), jnp.float32)
    box_pad = box_pad.at[:B * T, :box_dim].set(
        output_box.astype(jnp.float32).reshape(B * T, box_dim))

    # Row tile <= 256 keeps the GMM temporaries from spilling the vreg file and keeps
    # double-buffered row blocks well inside v7x's 64 MiB VMEM (v5e: 16 MiB scoped
    # default).  'parallel' lets the tiles shard across v7x's two TensorCores.
    row_tile = NS if NS <= 256 else 256
    assert NS % row_tile == 0, "demo wrapper assumes B*S divisible by the row tile"
    grid = (NS // row_tile,)

    def row_spec(w):
        return pl.BlockSpec((row_tile, w), lambda i: (i, 0))

    def full_spec(arr):
        return pl.BlockSpec(arr.shape, lambda i: (0,) * arr.ndim)

    inputs = (prep["gp"], prep["is0"], prep["rbc"], box_pad, enc_rows, gf,
              prep["wslab"], prep["gslab"], prep["sslab"], prep["fslab"], prep["gbias"])
    in_specs = [row_spec(NTP), row_spec(1), row_spec(B), full_spec(box_pad),
                row_spec(H), full_spec(gf), full_spec(prep["wslab"]),
                full_spec(prep["gslab"]), full_spec(prep["sslab"]),
                full_spec(prep["fslab"]), full_spec(prep["gbias"])]
    out_shape = (jax.ShapeDtypeStruct((NS, H), jnp.float32),      # box_predictor_input
                 jax.ShapeDtypeStruct((NS, LANE), jnp.float32))   # packed small outputs
    out_specs = (row_spec(H), row_spec(LANE))

    bpi, packed = pl.pallas_call(
        _pdf_decoder_kernel,
        out_shape=out_shape,
        grid=grid,
        in_specs=in_specs,
        out_specs=out_specs,
        compiler_params=pltpu.CompilerParams(dimension_semantics=("parallel",)),
    )(*inputs)

    xy_gmm = packed[:, 0:GMM_DIM].reshape(B, S, GMM_DIM)
    wh_gmm = packed[:, GMM_DIM:2 * GMM_DIM].reshape(B, S, GMM_DIM)
    sample_xy = packed[:, L_XY:L_XY + 2].reshape(B, S, 2)
    sample_wh = packed[:, L_WH:L_WH + 2].reshape(B, S, 2)
    xy_pdf = packed[:, L_PDF].reshape(B, S)
    return (bpi.reshape(B, S, H), sample_wh, sample_xy, wh_gmm, xy_gmm, xy_pdf)


# ----------------------------------------------------------------------------
# plain-JAX mirror of the same (stubbed, bf16-weight) forward, for verification
# ----------------------------------------------------------------------------
def _reference_forward(output_box, output_context, encoder_output, global_mask, Q,
                       is_train=True):
    B, S, H = encoder_output.shape
    bf16 = jnp.bfloat16

    def qdot(x, w):
        return jnp.dot(x.astype(bf16), jnp.asarray(w).astype(bf16),
                       preferred_element_type=jnp.float32)

    obc = jnp.abs(output_box)
    obc = obc.at[:, 2::2, :].set(obc[:, 1::2, :])                # train-path strided copy
    gf_src = encoder_output if is_train else output_context
    gf = jnp.max(jnp.where(global_mask[..., None], gf_src, -1e30), axis=1)   # (B,H)

    obe = qdot(obc, Q["w_be"]) + Q["b_be"]
    enc = encoder_output
    out_dec = qdot(enc[:, 1:, :], Q["A"]) + qdot(obe, Q["Bm"]) + Q["c_dec"]
    out_row0 = qdot(enc[:, :1, :], Q["w_ot"]) + qdot(obe[:, :1, :], Q["w_ob"])
    bpi = (jnp.concatenate([out_row0, out_dec], axis=1)
           + qdot(gf, Q["w_og"])[:, None, :] + Q["b_o"])

    def gmm_params(g):
        K = GMM_COMP
        g2 = g.reshape(-1, GMM_DIM)
        pi = jax.nn.softmax(g2[:, :K], axis=-1)
        return (pi, g2[:, K:2 * K], g2[:, 2 * K:3 * K],
                jnp.exp(g2[:, 3 * K:4 * K]), jnp.exp(g2[:, 4 * K:5 * K]),
                jnp.clip(jnp.tanh(g2[:, 5 * K:6 * K]), -0.95, 0.95))

    def greedy(pi, ua, ub):
        oh = jax.nn.one_hot(jnp.argmax(pi, axis=-1), GMM_COMP, dtype=jnp.float32)
        return (jnp.sum(ua * oh, -1, keepdims=True),
                jnp.sum(ub * oh, -1, keepdims=True))

    xy_gmm = qdot(bpi, Q["w_xy"]) + Q["b_xy"]
    pi, ux, uy, sx, sy, rho = gmm_params(xy_gmm)
    xs, ys = greedy(pi, ux, uy)
    dx, dy = xs - ux, ys - uy
    z = (dx / sx) ** 2 + (dy / sy) ** 2 - 2.0 * rho * dx * dy / (sx * sy)
    norm = jnp.maximum(2.0 * math.pi * sx * sy * jnp.sqrt(1.0 - rho ** 2), 1e-5)
    xy_pdf = jnp.sum(pi * jnp.exp(-z / (2.0 * (1.0 - rho ** 2))) / norm, axis=-1)
    sxy = jnp.concatenate([xs, ys], -1).reshape(B, S, 2)

    xe = sxy[..., 0:1] * Q["w_xe"][0] + sxy[..., 1:2] * Q["w_xe"][1] + Q["b_xe"]
    wh_gmm = qdot(bpi, Q["w_whx"]) + qdot(xe, Q["w_whe"]) + Q["b_wh"]
    pi_w, uw, uh, *_ = gmm_params(wh_gmm)
    ws, hs = greedy(pi_w, uw, uh)
    swh = jnp.concatenate([ws, hs], -1).reshape(B, S, 2)
    return (bpi, swh, sxy, wh_gmm, xy_gmm, xy_pdf.reshape(B, S))


# ----------------------------------------------------------------------------
# numerically robust checks (greedy argmax can legitimately tie-break either way)
# ----------------------------------------------------------------------------
def _softmax_np(logits):
    e = np.exp(logits - logits.max(1, keepdims=True))
    return e / e.sum(1, keepdims=True)


def _pdf_at(gmm, point):
    g = np.asarray(gmm, np.float64).reshape(-1, GMM_DIM)
    p = np.asarray(point, np.float64).reshape(-1, 2)
    K = GMM_COMP
    pi = _softmax_np(g[:, :K])
    ux, uy = g[:, K:2 * K], g[:, 2 * K:3 * K]
    sx, sy = np.exp(g[:, 3 * K:4 * K]), np.exp(g[:, 4 * K:5 * K])
    rho = np.clip(np.tanh(g[:, 5 * K:6 * K]), -0.95, 0.95)
    dx, dy = p[:, :1] - ux, p[:, 1:2] - uy
    z = (dx / sx) ** 2 + (dy / sy) ** 2 - 2 * rho * dx * dy / (sx * sy)
    norm = np.maximum(2 * math.pi * sx * sy * np.sqrt(1 - rho ** 2), 1e-5)
    return np.sum(pi * np.exp(-z / (2 * (1 - rho ** 2))) / norm, axis=1)


def _check_greedy_sample(sample, gmm, name, atol=5e-3, pi_slack=2e-2):
    g = np.asarray(gmm, np.float64).reshape(-1, GMM_DIM)
    s = np.asarray(sample, np.float64).reshape(-1, 2)
    K = GMM_COMP
    pi = _softmax_np(g[:, :K])
    ua, ub = g[:, K:2 * K], g[:, 2 * K:3 * K]
    near_max = pi >= pi.max(1, keepdims=True) - pi_slack
    hit = (np.abs(s[:, :1] - ua) < atol) & (np.abs(s[:, 1:2] - ub) < atol) & near_max
    assert hit.any(axis=1).all(), f"{name}: sample is not a (near-)argmax component mean"


# ----------------------------------------------------------------------------
# deterministic parameter init + driver
# ----------------------------------------------------------------------------
def _init_linear(key, din, dout, scale=0.05):
    kw, kb = jax.random.split(key)
    w = scale * jax.random.normal(kw, (din, dout), jnp.float32)
    b = scale * jax.random.normal(kb, (dout,), jnp.float32)
    return w, b


if __name__ == "__main__":
    B, S, HID, BOX_DIM = 2, 8, 128, 4
    T = S - 1  # 7

    root = jax.random.PRNGKey(0)
    k = jax.random.split(root, 10)
    params = {
        "box_embedding": _init_linear(k[0], BOX_DIM, AUG),
        "decoder_standin": _init_linear(k[1], HID + AUG, HID + AUG),
        "output_layer": _init_linear(k[2], 2 * HID + AUG, HID),
        "xy_bivariate": _init_linear(k[3], HID, GMM_DIM),
        "xy_embedding": _init_linear(k[4], 2, AUG),
        "wh_bivariate": _init_linear(k[5], HID + AUG, GMM_DIM),
    }

    output_box = jax.random.normal(k[6], (B, T, BOX_DIM), jnp.float32)
    encoder_output = jax.random.normal(k[7], (B, S, HID), jnp.float32)
    output_context = jax.random.normal(k[8], (B, S, HID), jnp.float32)
    lengths = jnp.array([S, S - 2])
    global_mask = jnp.arange(S)[None, :] < lengths[:, None]          # (B, S) bool

    Q = _fold_quantize(params, HID)
    prep = _build_prep(Q, B, S, HID)

    fwd = jax.jit(functools.partial(pdf_decoder_forward, prep=prep, is_train=True))
    outs = fwd(output_box, output_context, encoder_output, global_mask)
    jax.block_until_ready(outs)

    bpi, sample_wh, sample_xy, wh_gmm, xy_gmm, xy_pdf = outs
    assert bpi.shape == (B, S, HID)
    assert sample_wh.shape == (B, S, 2) and sample_xy.shape == (B, S, 2)
    assert wh_gmm.shape == (B, S, GMM_DIM) and xy_gmm.shape == (B, S, GMM_DIM)
    assert xy_pdf.shape == (B, S)
    for name, arr in zip(("bpi", "sample_wh", "sample_xy", "wh_gmm", "xy_gmm", "xy_pdf"),
                         outs):
        assert bool(jnp.all(jnp.isfinite(arr))), name

    refs = _reference_forward(output_box, output_context, encoder_output, global_mask,
                              Q, is_train=True)
    r_bpi, r_swh, r_sxy, r_whg, r_xyg, r_pdf = refs

    def close(name, a, b, rtol, atol):
        assert jnp.allclose(a, b, rtol=rtol, atol=atol), (
            name, float(jnp.max(jnp.abs(a - b))))

    close("bpi", bpi, r_bpi, 1e-2, 1e-2)
    close("xy_gmm", xy_gmm, r_xyg, 1e-2, 1e-2)
    close("wh_gmm", wh_gmm, r_whg, 1e-2, 1e-2)
    # greedy samples must be a (near-)argmax component mean of the reference GMM
    _check_greedy_sample(sample_xy, r_xyg, "sample_xy")
    _check_greedy_sample(sample_wh, r_whg, "sample_wh")
    # pdf: reference mixture evaluated at the kernel's own sampled point
    want_pdf = _pdf_at(r_xyg, sample_xy).reshape(B, S)
    assert jnp.allclose(xy_pdf, jnp.asarray(want_pdf, jnp.float32),
                        rtol=5e-2, atol=1e-3), (
        "xy_pdf", float(jnp.max(jnp.abs(xy_pdf - jnp.asarray(want_pdf, jnp.float32)))))

    print("KERNEL_OK")
</pallas_src>

<mosaic_0001>
module attributes {stable_mosaic.version = 11 : i64} {
  func.func @_pdf_decoder_kernel(%arg0: i32, %arg1: memref<16x16xf32, #tpu.memory_space<vmem>>, %arg2: memref<16x1xf32, #tpu.memory_space<vmem>>, %arg3: memref<16x2xf32, #tpu.memory_space<vmem>>, %arg4: memref<16x8xf32, #tpu.memory_space<vmem>>, %arg5: memref<16x128xf32, #tpu.memory_space<vmem>>, %arg6: memref<2x128xf32, #tpu.memory_space<vmem>>, %arg7: memref<712x128xbf16, #tpu.memory_space<vmem>>, %arg8: memref<384x32xbf16, #tpu.memory_space<vmem>>, %arg9: memref<64x768xbf16, #tpu.memory_space<vmem>>, %arg10: memref<8x128xf32, #tpu.memory_space<vmem>>, %arg11: memref<8x32xf32, #tpu.memory_space<vmem>>, %arg12: memref<16x128xf32, #tpu.memory_space<vmem>>, %arg13: memref<16x128xf32, #tpu.memory_space<vmem>>) attributes {dimension_semantics = [#tpu.dimension_semantics<parallel>], iteration_bounds = array<i64: 1>, scalar_prefetch = 0 : i64, scratch_operands = 0 : i64, tpu.core_type = #tpu.core_type<tc>, window_params = [{transform_indices = @transform_0, window_bounds = array<i64: 16, 16>}, {transform_indices = @transform_1, window_bounds = array<i64: 16, 1>}, {transform_indices = @transform_2, window_bounds = array<i64: 16, 2>}, {pipeline_mode = #tpu.pipeline_mode<synchronous>, transform_indices = @transform_3, window_bounds = array<i64: 16, 8>}, {transform_indices = @transform_4, window_bounds = array<i64: 16, 128>}, {pipeline_mode = #tpu.pipeline_mode<synchronous>, transform_indices = @transform_5, window_bounds = array<i64: 2, 128>}, {pipeline_mode = #tpu.pipeline_mode<synchronous>, transform_indices = @transform_6, window_bounds = array<i64: 712, 128>}, {pipeline_mode = #tpu.pipeline_mode<synchronous>, transform_indices = @transform_7, window_bounds = array<i64: 384, 32>}, {pipeline_mode = #tpu.pipeline_mode<synchronous>, transform_indices = @transform_8, window_bounds = array<i64: 64, 768>}, {pipeline_mode = #tpu.pipeline_mode<synchronous>, transform_indices = @transform_9, window_bounds = array<i64: 8, 128>}, {pipeline_mode = #tpu.pipeline_mode<synchronous>, transform_indices = @transform_10, window_bounds = array<i64: 8, 32>}, {transform_indices = @transform_11, window_bounds = array<i64: 16, 128>}, {transform_indices = @transform_12, window_bounds = array<i64: 16, 128>}]} {
    %c0 = arith.constant 0 : index
    %c0_0 = arith.constant 0 : index
    %0 = vector.load %arg7[%c0, %c0_0] : memref<712x128xbf16, #tpu.memory_space<vmem>>, vector<8x128xbf16>
    %c8 = arith.constant 8 : index
    %c0_1 = arith.constant 0 : index
    %1 = vector.load %arg7[%c8, %c0_1] : memref<712x128xbf16, #tpu.memory_space<vmem>>, vector<128x128xbf16>
    %c136 = arith.constant 136 : index
    %c0_2 = arith.constant 0 : index
    %2 = vector.load %arg7[%c136, %c0_2] : memref<712x128xbf16, #tpu.memory_space<vmem>>, vector<128x128xbf16>
    %c264 = arith.constant 264 : index
    %c0_3 = arith.constant 0 : index
    %3 = vector.load %arg7[%c264, %c0_3] : memref<712x128xbf16, #tpu.memory_space<vmem>>, vector<128x128xbf16>
    %c392 = arith.constant 392 : index
    %c0_4 = arith.constant 0 : index
    %4 = vector.load %arg7[%c392, %c0_4] : memref<712x128xbf16, #tpu.memory_space<vmem>>, vector<128x128xbf16>
    %c520 = arith.constant 520 : index
    %c0_5 = arith.constant 0 : index
    %5 = vector.load %arg7[%c520, %c0_5] : memref<712x128xbf16, #tpu.memory_space<vmem>>, vector<128x128xbf16>
    %c648 = arith.constant 648 : index
    %c0_6 = arith.constant 0 : index
    %6 = vector.load %arg7[%c648, %c0_6] : memref<712x128xbf16, #tpu.memory_space<vmem>>, vector<32x128xbf16>
    %7 = arith.extf %6 : vector<32x128xbf16> to vector<32x128xf32>
    %c680 = arith.constant 680 : index
    %c0_7 = arith.constant 0 : index
    %8 = vector.load %arg7[%c680, %c0_7] : memref<712x128xbf16, #tpu.memory_space<vmem>>, vector<32x128xbf16>
    %9 = arith.extf %8 : vector<32x128xbf16> to vector<32x128xf32>
    %c0_8 = arith.constant 0 : index
    %c0_9 = arith.constant 0 : index
    %10 = vector.load %arg8[%c0_8, %c0_9] : memref<384x32xbf16, #tpu.memory_space<vmem>>, vector<128x32xbf16>
    %c128 = arith.constant 128 : index
    %c0_10 = arith.constant 0 : index
    %11 = vector.load %arg8[%c128, %c0_10] : memref<384x32xbf16, #tpu.memory_space<vmem>>, vector<128x32xbf16>
    %c256 = arith.constant 256 : index
    %c0_11 = arith.constant 0 : index
    %12 = vector.load %arg8[%c256, %c0_11] : memref<384x32xbf16, #tpu.memory_space<vmem>>, vector<128x32xbf16>
    %c0_12 = arith.constant 0 : index
    %c0_13 = arith.constant 0 : index
    %13 = vector.load %arg9[%c0_12, %c0_13] : memref<64x768xbf16, #tpu.memory_space<vmem>>, vector<32x768xbf16>
    %14 = arith.extf %13 : vector<32x768xbf16> to vector<32x768xf32>
    %c32 = arith.constant 32 : index
    %c0_14 = arith.constant 0 : index
    %15 = vector.load %arg9[%c32, %c0_14] : memref<64x768xbf16, #tpu.memory_space<vmem>>, vector<32x768xbf16>
    %16 = arith.extf %15 : vector<32x768xbf16> to vector<32x768xf32>
    %c0_15 = arith.constant 0 : index
    %c0_16 = arith.constant 0 : index
    %17 = vector.load %arg10[%c0_15, %c0_16] : memref<8x128xf32, #tpu.memory_space<vmem>>, vector<1x128xf32>
    %c1 = arith.constant 1 : index
    %c0_17 = arith.constant 0 : index
    %18 = vector.load %arg10[%c1, %c0_17] : memref<8x128xf32, #tpu.memory_space<vmem>>, vector<1x128xf32>
    %c2 = arith.constant 2 : index
    %c0_18 = arith.constant 0 : index
    %19 = vector.load %arg10[%c2, %c0_18] : memref<8x128xf32, #tpu.memory_space<vmem>>, vector<1x128xf32>
    %c3 = arith.constant 3 : index
    %c0_19 = arith.constant 0 : index
    %20 = vector.load %arg10[%c3, %c0_19] : memref<8x128xf32, #tpu.memory_space<vmem>>, vector<1x128xf32>
    %c4 = arith.constant 4 : index
    %c0_20 = arith.constant 0 : index
    %21 = vector.load %arg10[%c4, %c0_20] : memref<8x128xf32, #tpu.memory_space<vmem>>, vector<1x128xf32>
    %c5 = arith.constant 5 : index
    %c0_21 = arith.constant 0 : index
    %22 = vector.load %arg10[%c5, %c0_21] : memref<8x128xf32, #tpu.memory_space<vmem>>, vector<1x128xf32>
    %c0_22 = arith.constant 0 : index
    %c0_23 = arith.constant 0 : index
    %23 = vector.load %arg11[%c0_22, %c0_23] : memref<8x32xf32, #tpu.memory_space<vmem>>, vector<1x32xf32>
    %c1_24 = arith.constant 1 : index
    %c0_25 = arith.constant 0 : index
    %24 = vector.load %arg11[%c1_24, %c0_25] : memref<8x32xf32, #tpu.memory_space<vmem>>, vector<1x32xf32>
    %c0_26 = arith.constant 0 : index
    %c0_27 = arith.constant 0 : index
    %25 = vector.load %arg1[%c0_26, %c0_27] : memref<16x16xf32, #tpu.memory_space<vmem>>, vector<16x16xf32>
    %c0_28 = arith.constant 0 : index
    %c0_29 = arith.constant 0 : index
    %26 = vector.load %arg4[%c0_28, %c0_29] : memref<16x8xf32, #tpu.memory_space<vmem>>, vector<16x8xf32>
    %27 = math.absf %26 : vector<16x8xf32>
    %cst = arith.constant dense<0.000000e+00> : vector<16x8xf32>
    %28 = tpu.matmul %25, %27, %cst {dimension_numbers = #tpu.dot_dimension_numbers<[1], [0], [0], [1], [0, 0, 1, 1], [], []>} : vector<16x16xf32>, vector<16x8xf32>, vector<16x8xf32> -> vector<16x8xf32>
    %29 = arith.truncf %28 : vector<16x8xf32> to vector<16x8xbf16>
    %cst_30 = arith.constant dense<0.000000e+00> : vector<16x128xf32>
    %30 = tpu.matmul %29, %0, %cst_30 {dimension_numbers = #tpu.dot_dimension_numbers<[1], [0], [0], [1], [0, 0, 1, 1], [], []>} : vector<16x8xbf16>, vector<8x128xbf16>, vector<16x128xf32> -> vector<16x128xf32>
    %31 = vector.broadcast %17 : vector<1x128xf32> to vector<16x128xf32>
    %32 = arith.addf %30, %31 : vector<16x128xf32>
    %c0_31 = arith.constant 0 : index
    %c0_32 = arith.constant 0 : index
    %33 = vector.load %arg5[%c0_31, %c0_32] : memref<16x128xf32, #tpu.memory_space<vmem>>, vector<16x128xf32>
    %34 = arith.truncf %33 : vector<16x128xf32> to vector<16x128xbf16>
    %35 = arith.truncf %32 : vector<16x128xf32> to vector<16x128xbf16>
    %cst_33 = arith.constant dense<0.000000e+00> : vector<16x128xf32>
    %36 = tpu.matmul %34, %1, %cst_33 {dimension_numbers = #tpu.dot_dimension_numbers<[1], [0], [0], [1], [0, 0, 1, 1], [], []>} : vector<16x128xbf16>, vector<128x128xbf16>, vector<16x128xf32> -> vector<16x128xf32>
    %cst_34 = arith.constant dense<0.000000e+00> : vector<16x128xf32>
    %37 = tpu.matmul %35, %4, %cst_34 {dimension_numbers = #tpu.dot_dimension_numbers<[1], [0], [0], [1], [0, 0, 1, 1], [], []>} : vector<16x128xbf16>, vector<128x128xbf16>, vector<16x128xf32> -> vector<16x128xf32>
    %38 = arith.addf %36, %37 : vector<16x128xf32>
    %39 = vector.broadcast %18 : vector<1x128xf32> to vector<16x128xf32>
    %40 = arith.addf %38, %39 : vector<16x128xf32>
    %cst_35 = arith.constant dense<0.000000e+00> : vector<16x128xf32>
    %41 = tpu.matmul %34, %2, %cst_35 {dimension_numbers = #tpu.dot_dimension_numbers<[1], [0], [0], [1], [0, 0, 1, 1], [], []>} : vector<16x128xbf16>, vector<128x128xbf16>, vector<16x128xf32> -> vector<16x128xf32>
    %cst_36 = arith.constant dense<0.000000e+00> : vector<16x128xf32>
    %42 = tpu.matmul %35, %5, %cst_36 {dimension_numbers = #tpu.dot_dimension_numbers<[1], [0], [0], [1], [0, 0, 1, 1], [], []>} : vector<16x128xbf16>, vector<128x128xbf16>, vector<16x128xf32> -> vector<16x128xf32>
    %43 = arith.addf %41, %42 : vector<16x128xf32>
    %c0_37 = arith.constant 0 : index
    %c0_38 = arith.constant 0 : index
    %44 = vector.load %arg3[%c0_37, %c0_38] : memref<16x2xf32, #tpu.memory_space<vmem>>, vector<16x2xf32>
    %c0_39 = arith.constant 0 : index
    %c0_40 = arith.constant 0 : index
    %45 = vector.load %arg6[%c0_39, %c0_40] : memref<2x128xf32, #tpu.memory_space<vmem>>, vector<2x128xf32>
    %cst_41 = arith.constant dense<0.000000e+00> : vector<16x128xf32>
    %46 = tpu.matmul %44, %45, %cst_41 {dimension_numbers = #tpu.dot_dimension_numbers<[1], [0], [0], [1], [0, 0, 1, 1], [], []>} : vector<16x2xf32>, vector<2x128xf32>, vector<16x128xf32> -> vector<16x128xf32>
    %c0_42 = arith.constant 0 : index
    %c0_43 = arith.constant 0 : index
    %47 = vector.load %arg2[%c0_42, %c0_43] : memref<16x1xf32, #tpu.memory_space<vmem>>, vector<16x1xf32>
    %cst_44 = arith.constant 5.000000e-01 : f32
    %48 = vector.broadcast %cst_44 : f32 to vector<16x1xf32>
    %49 = arith.cmpf ogt, %47, %48 : vector<16x1xf32>
    %50 = vector.shape_cast %49 : vector<16x1xi1> to vector<16x1xi1>
    %51 = vector.broadcast %50 : vector<16x1xi1> to vector<16x128xi1>
    %52 = arith.select %51, %43, %40 : vector<16x128xi1>, vector<16x128xf32>
    %53 = arith.truncf %46 : vector<16x128xf32> to vector<16x128xbf16>
    %cst_45 = arith.constant dense<0.000000e+00> : vector<16x128xf32>
    %54 = tpu.matmul %53, %3, %cst_45 {dimension_numbers = #tpu.dot_dimension_numbers<[1], [0], [0], [1], [0, 0, 1, 1], [], []>} : vector<16x128xbf16>, vector<128x128xbf16>, vector<16x128xf32> -> vector<16x128xf32>
    %55 = arith.addf %52, %54 : vector<16x128xf32>
    %56 = vector.broadcast %19 : vector<1x128xf32> to vector<16x128xf32>
    %57 = arith.addf %55, %56 : vector<16x128xf32>
    %c0_46 = arith.constant 0 : index
    %c0_47 = arith.constant 0 : index
    %58 = vector.load %arg12[%c0_46, %c0_47] : memref<16x128xf32, #tpu.memory_space<vmem>>, vector<16x128xf32>
    tpu.vector_store %arg12[%c0_46, %c0_47], %57 {strides = array<i32>} : memref<16x128xf32, #tpu.memory_space<vmem>>, vector<16x128xf32>,
    %59 = arith.truncf %57 : vector<16x128xf32> to vector<16x128xbf16>
    %60 = tpu.iota {dimensions = array<i32: 1>} : vector<16x128xi32>
    %c5_i32 = arith.constant 5 : i32
    %61 = vector.broadcast %c5_i32 : i32 to vector<16x128xi32>
    %62 = arith.cmpi slt, %60, %61 : vector<16x128xi32>
    %cst_48 = arith.constant dense<0.000000e+00> : vector<16x32xf32>
    %63 = tpu.matmul %59, %10, %cst_48 {dimension_numbers = #tpu.dot_dimension_numbers<[1], [0], [0], [1], [0, 0, 1, 1], [], []>} : vector<16x128xbf16>, vector<128x32xbf16>, vector<16x32xf32> -> vector<16x32xf32>
    %64 = vector.broadcast %23 : vector<1x32xf32> to vector<16x32xf32>
    %65 = arith.addf %63, %64 : vector<16x32xf32>
    %cst_49 = arith.constant dense<0.000000e+00> : vector<16x768xf32>
    %66 = tpu.matmul %65, %14, %cst_49 {dimension_numbers = #tpu.dot_dimension_numbers<[1], [0], [0], [1], [0, 0, 1, 1], [], []>} : vector<16x32xf32>, vector<32x768xf32>, vector<16x768xf32> -> vector<16x768xf32>
    %67 = vector.extract_strided_slice %66 {offsets = [0, 0], sizes = [16, 128], strides = [1, 1]} : vector<16x768xf32> to vector<16x128xf32>
    %68 = vector.extract_strided_slice %66 {offsets = [0, 128], sizes = [16, 128], strides = [1, 1]} : vector<16x768xf32> to vector<16x128xf32>
    %69 = vector.extract_strided_slice %66 {offsets = [0, 256], sizes = [16, 128], strides = [1, 1]} : vector<16x768xf32> to vector<16x128xf32>
    %cst_50 = arith.constant -1.000000e+30 : f32
    %70 = vector.broadcast %cst_50 : f32 to vector<16x128xf32>
    %71 = arith.select %62, %67, %70 : vector<16x128xi1>, vector<16x128xf32>
    %cst_51 = arith.constant dense<0xFF800000> : vector<16xf32>
    %72 = vector.multi_reduction <maximumf>, %71, %cst_51 [1] : vector<16x128xf32> to vector<16xf32>
    %73 = vector.shape_cast %72 : vector<16xf32> to vector<16x1xf32>
    %74 = vector.broadcast %73 : vector<16x1xf32> to vector<16x128xf32>
    %75 = arith.subf %71, %74 : vector<16x128xf32>
    %76 = math.exp %75 : vector<16x128xf32>
    %cst_52 = arith.constant dense<0.000000e+00> : vector<16xf32>
    %77 = vector.multi_reduction <add>, %76, %cst_52 [1] : vector<16x128xf32> to vector<16xf32>
    %78 = vector.shape_cast %77 : vector<16xf32> to vector<16x1xf32>
    %79 = tpu.reciprocal %78 {approx = true} : vector<16x1xf32> -> vector<16x1xf32>
    %80 = vector.broadcast %79 : vector<16x1xf32> to vector<16x128xf32>
    %81 = arith.mulf %76, %80 : vector<16x128xf32>
    %cst_53 = arith.constant dense<0xFF800000> : vector<16xf32>
    %82 = vector.multi_reduction <maximumf>, %81, %cst_53 [1] : vector<16x128xf32> to vector<16xf32>
    %83 = vector.shape_cast %82 : vector<16xf32> to vector<16x1xf32>
    %84 = vector.broadcast %83 : vector<16x1xf32> to vector<16x128xf32>
    %85 = arith.cmpf oge, %81, %84 : vector<16x128xf32>
    %c128_i32 = arith.constant 128 : i32
    %86 = vector.broadcast %c128_i32 : i32 to vector<16x128xi32>
    %87 = arith.select %85, %60, %86 : vector<16x128xi1>, vector<16x128xi32>
    %cst_54 = arith.constant dense<2147483647> : vector<16xi32>
    %88 = vector.multi_reduction <minsi>, %87, %cst_54 [1] : vector<16x128xi32> to vector<16xi32>
    %89 = vector.shape_cast %88 : vector<16xi32> to vector<16x1xi32>
    %90 = vector.broadcast %89 : vector<16x1xi32> to vector<16x128xi32>
    %91 = arith.cmpi eq, %60, %90 : vector<16x128xi32>
    %92 = arith.extui %91 : vector<16x128xi1> to vector<16x128xi32>
    %93 = arith.sitofp %92 : vector<16x128xi32> to vector<16x128xf32>
    %94 = arith.mulf %68, %93 : vector<16x128xf32>
    %cst_55 = arith.constant dense<0.000000e+00> : vector<16xf32>
    %95 = vector.multi_reduction <add>, %94, %cst_55 [1] : vector<16x128xf32> to vector<16xf32>
    %96 = vector.shape_cast %95 : vector<16xf32> to vector<16x1xf32>
    %97 = arith.mulf %69, %93 : vector<16x128xf32>
    %cst_56 = arith.constant dense<0.000000e+00> : vector<16xf32>
    %98 = vector.multi_reduction <add>, %97, %cst_56 [1] : vector<16x128xf32> to vector<16xf32>
    %99 = vector.shape_cast %98 : vector<16xf32> to vector<16x1xf32>
    %100 = vector.extract_strided_slice %66 {offsets = [0, 128], sizes = [16, 128], strides = [1, 1]} : vector<16x768xf32> to vector<16x128xf32>
    %101 = vector.extract_strided_slice %66 {offsets = [0, 256], sizes = [16, 128], strides = [1, 1]} : vector<16x768xf32> to vector<16x128xf32>
    %102 = vector.extract_strided_slice %66 {offsets = [0, 384], sizes = [16, 128], strides = [1, 1]} : vector<16x768xf32> to vector<16x128xf32>
    %103 = vector.extract_strided_slice %66 {offsets = [0, 512], sizes = [16, 128], strides = [1, 1]} : vector<16x768xf32> to vector<16x128xf32>
    %104 = vector.extract_strided_slice %66 {offsets = [0, 640], sizes = [16, 128], strides = [1, 1]} : vector<16x768xf32> to vector<16x128xf32>
    %cst_57 = arith.constant 0.000000e+00 : f32
    %105 = vector.broadcast %cst_57 : f32 to vector<16x128xf32>
    %106 = arith.subf %105, %102 : vector<16x128xf32>
    %107 = math.exp %106 : vector<16x128xf32>
    %cst_58 = arith.constant 0.000000e+00 : f32
    %108 = vector.broadcast %cst_58 : f32 to vector<16x128xf32>
    %109 = arith.subf %108, %103 : vector<16x128xf32>
    %110 = math.exp %109 : vector<16x128xf32>
    %111 = math.tanh %104 : vector<16x128xf32>
    %cst_59 = arith.constant -0.949999988 : f32
    %cst_60 = arith.constant 0.949999988 : f32
    %112 = vector.broadcast %cst_59 : f32 to vector<16x128xf32>
    %113 = arith.maximumf %112, %111 : vector<16x128xf32>
    %114 = vector.broadcast %cst_60 : f32 to vector<16x128xf32>
    %115 = arith.minimumf %114, %113 : vector<16x128xf32>
    %116 = vector.broadcast %96 : vector<16x1xf32> to vector<16x128xf32>
    %117 = arith.subf %116, %100 : vector<16x128xf32>
    %118 = vector.broadcast %99 : vector<16x1xf32> to vector<16x128xf32>
    %119 = arith.subf %118, %101 : vector<16x128xf32>
    %120 = arith.mulf %117, %107 : vector<16x128xf32>
    %121 = arith.mulf %120, %120 : vector<16x128xf32>
    %122 = arith.mulf %119, %110 : vector<16x128xf32>
    %123 = arith.mulf %122, %122 : vector<16x128xf32>
    %124 = arith.addf %121, %123 : vector<16x128xf32>
    %cst_61 = arith.constant 2.000000e+00 : f32
    %125 = vector.broadcast %cst_61 : f32 to vector<16x128xf32>
    %126 = arith.mulf %125, %115 : vector<16x128xf32>
    %127 = arith.mulf %117, %119 : vector<16x128xf32>
    %128 = arith.mulf %127, %107 : vector<16x128xf32>
    %129 = arith.mulf %128, %110 : vector<16x128xf32>
    %130 = arith.mulf %126, %129 : vector<16x128xf32>
    %131 = arith.subf %124, %130 : vector<16x128xf32>
    %132 = arith.mulf %115, %115 : vector<16x128xf32>
    %cst_62 = arith.constant 1.000000e+00 : f32
    %133 = vector.broadcast %cst_62 : f32 to vector<16x128xf32>
    %134 = arith.subf %133, %132 : vector<16x128xf32>
    %cst_63 = arith.constant -5.000000e-01 : f32
    %135 = vector.broadcast %cst_63 : f32 to vector<16x128xf32>
    %136 = arith.mulf %135, %131 : vector<16x128xf32>
    %137 = arith.divf %136, %134 : vector<16x128xf32>
    %138 = arith.addf %102, %103 : vector<16x128xf32>
    %139 = math.exp %138 : vector<16x128xf32>
    %cst_64 = arith.constant 6.28318548 : f32
    %140 = vector.broadcast %cst_64 : f32 to vector<16x128xf32>
    %141 = arith.mulf %140, %139 : vector<16x128xf32>
    %142 = math.sqrt %134 : vector<16x128xf32>
    %143 = arith.mulf %141, %142 : vector<16x128xf32>
    %cst_65 = arith.constant 9.99999974E-6 : f32
    %144 = vector.broadcast %cst_65 : f32 to vector<16x128xf32>
    %145 = arith.maximumf %143, %144 : vector<16x128xf32>
    %146 = math.exp %137 : vector<16x128xf32>
    %147 = arith.mulf %81, %146 : vector<16x128xf32>
    %148 = arith.divf %147, %145 : vector<16x128xf32>
    %cst_66 = arith.constant 0.000000e+00 : f32
    %149 = vector.broadcast %cst_66 : f32 to vector<16x128xf32>
    %150 = arith.select %62, %148, %149 : vector<16x128xi1>, vector<16x128xf32>
    %cst_67 = arith.constant dense<0.000000e+00> : vector<16xf32>
    %151 = vector.multi_reduction <add>, %150, %cst_67 [1] : vector<16x128xf32> to vector<16xf32>
    %152 = vector.shape_cast %151 : vector<16xf32> to vector<16x1xf32>
    %153 = vector.broadcast %96 : vector<16x1xf32> to vector<16x128xf32>
    %154 = vector.broadcast %21 : vector<1x128xf32> to vector<16x128xf32>
    %155 = arith.mulf %153, %154 : vector<16x128xf32>
    %156 = vector.broadcast %99 : vector<16x1xf32> to vector<16x128xf32>
    %157 = vector.broadcast %22 : vector<1x128xf32> to vector<16x128xf32>
    %158 = arith.mulf %156, %157 : vector<16x128xf32>
    %159 = arith.addf %155, %158 : vector<16x128xf32>
    %160 = vector.broadcast %20 : vector<1x128xf32> to vector<16x128xf32>
    %161 = arith.addf %159, %160 : vector<16x128xf32>
    %cst_68 = arith.constant dense<0.000000e+00> : vector<16x32xf32>
    %162 = tpu.matmul %59, %11, %cst_68 {dimension_numbers = #tpu.dot_dimension_numbers<[1], [0], [0], [1], [0, 0, 1, 1], [], []>} : vector<16x128xbf16>, vector<128x32xbf16>, vector<16x32xf32> -> vector<16x32xf32>
    %163 = arith.truncf %161 : vector<16x128xf32> to vector<16x128xbf16>
    %cst_69 = arith.constant dense<0.000000e+00> : vector<16x32xf32>
    %164 = tpu.matmul %163, %12, %cst_69 {dimension_numbers = #tpu.dot_dimension_numbers<[1], [0], [0], [1], [0, 0, 1, 1], [], []>} : vector<16x128xbf16>, vector<128x32xbf16>, vector<16x32xf32> -> vector<16x32xf32>
    %165 = arith.addf %162, %164 : vector<16x32xf32>
    %166 = vector.broadcast %24 : vector<1x32xf32> to vector<16x32xf32>
    %167 = arith.addf %165, %166 : vector<16x32xf32>
    %cst_70 = arith.constant dense<0.000000e+00> : vector<16x768xf32>
    %168 = tpu.matmul %167, %16, %cst_70 {dimension_numbers = #tpu.dot_dimension_numbers<[1], [0], [0], [1], [0, 0, 1, 1], [], []>} : vector<16x32xf32>, vector<32x768xf32>, vector<16x768xf32> -> vector<16x768xf32>
    %169 = vector.extract_strided_slice %168 {offsets = [0, 0], sizes = [16, 128], strides = [1, 1]} : vector<16x768xf32> to vector<16x128xf32>
    %170 = vector.extract_strided_slice %168 {offsets = [0, 128], sizes = [16, 128], strides = [1, 1]} : vector<16x768xf32> to vector<16x128xf32>
    %171 = vector.extract_strided_slice %168 {offsets = [0, 256], sizes = [16, 128], strides = [1, 1]} : vector<16x768xf32> to vector<16x128xf32>
    %cst_71 = arith.constant -1.000000e+30 : f32
    %172 = vector.broadcast %cst_71 : f32 to vector<16x128xf32>
    %173 = arith.select %62, %169, %172 : vector<16x128xi1>, vector<16x128xf32>
    %cst_72 = arith.constant dense<0xFF800000> : vector<16xf32>
    %174 = vector.multi_reduction <maximumf>, %173, %cst_72 [1] : vector<16x128xf32> to vector<16xf32>
    %175 = vector.shape_cast %174 : vector<16xf32> to vector<16x1xf32>
    %176 = vector.broadcast %175 : vector<16x1xf32> to vector<16x128xf32>
    %177 = arith.subf %173, %176 : vector<16x128xf32>
    %178 = math.exp %177 : vector<16x128xf32>
    %cst_73 = arith.constant dense<0.000000e+00> : vector<16xf32>
    %179 = vector.multi_reduction <add>, %178, %cst_73 [1] : vector<16x128xf32> to vector<16xf32>
    %180 = vector.shape_cast %179 : vector<16xf32> to vector<16x1xf32>
    %181 = tpu.reciprocal %180 {approx = true} : vector<16x1xf32> -> vector<16x1xf32>
    %182 = vector.broadcast %181 : vector<16x1xf32> to vector<16x128xf32>
    %183 = arith.mulf %178, %182 : vector<16x128xf32>
    %cst_74 = arith.constant dense<0xFF800000> : vector<16xf32>
    %184 = vector.multi_reduction <maximumf>, %183, %cst_74 [1] : vector<16x128xf32> to vector<16xf32>
    %185 = vector.shape_cast %184 : vector<16xf32> to vector<16x1xf32>
    %186 = vector.broadcast %185 : vector<16x1xf32> to vector<16x128xf32>
    %187 = arith.cmpf oge, %183, %186 : vector<16x128xf32>
    %c128_i32_75 = arith.constant 128 : i32
    %188 = vector.broadcast %c128_i32_75 : i32 to vector<16x128xi32>
    %189 = arith.select %187, %60, %188 : vector<16x128xi1>, vector<16x128xi32>
    %cst_76 = arith.constant dense<2147483647> : vector<16xi32>
    %190 = vector.multi_reduction <minsi>, %189, %cst_76 [1] : vector<16x128xi32> to vector<16xi32>
    %191 = vector.shape_cast %190 : vector<16xi32> to vector<16x1xi32>
    %192 = vector.broadcast %191 : vector<16x1xi32> to vector<16x128xi32>
    %193 = arith.cmpi eq, %60, %192 : vector<16x128xi32>
    %194 = arith.extui %193 : vector<16x128xi1> to vector<16x128xi32>
    %195 = arith.sitofp %194 : vector<16x128xi32> to vector<16x128xf32>
    %196 = arith.mulf %170, %195 : vector<16x128xf32>
    %cst_77 = arith.constant dense<0.000000e+00> : vector<16xf32>
    %197 = vector.multi_reduction <add>, %196, %cst_77 [1] : vector<16x128xf32> to vector<16xf32>
    %198 = vector.shape_cast %197 : vector<16xf32> to vector<16x1xf32>
    %199 = arith.mulf %171, %195 : vector<16x128xf32>
    %cst_78 = arith.constant dense<0.000000e+00> : vector<16xf32>
    %200 = vector.multi_reduction <add>, %199, %cst_78 [1] : vector<16x128xf32> to vector<16xf32>
    %201 = vector.shape_cast %200 : vector<16xf32> to vector<16x1xf32>
    %cst_79 = arith.constant dense<0.000000e+00> : vector<16x128xf32>
    %202 = tpu.matmul %65, %7, %cst_79 {dimension_numbers = #tpu.dot_dimension_numbers<[1], [0], [0], [1], [0, 0, 1, 1], [], []>} : vector<16x32xf32>, vector<32x128xf32>, vector<16x128xf32> -> vector<16x128xf32>
    %cst_80 = arith.constant dense<0.000000e+00> : vector<16x128xf32>
    %203 = tpu.matmul %167, %9, %cst_80 {dimension_numbers = #tpu.dot_dimension_numbers<[1], [0], [0], [1], [0, 0, 1, 1], [], []>} : vector<16x32xf32>, vector<32x128xf32>, vector<16x128xf32> -> vector<16x128xf32>
    %204 = arith.addf %202, %203 : vector<16x128xf32>
    %c60_i32 = arith.constant 60 : i32
    %205 = vector.broadcast %c60_i32 : i32 to vector<16x128xi32>
    %206 = arith.cmpi eq, %60, %205 : vector<16x128xi32>
    %207 = vector.shape_cast %96 : vector<16x1xf32> to vector<16x1xf32>
    %208 = vector.broadcast %207 : vector<16x1xf32> to vector<16x128xf32>
    %209 = arith.select %206, %208, %204 : vector<16x128xi1>, vector<16x128xf32>
    %c61_i32 = arith.constant 61 : i32
    %210 = vector.broadcast %c61_i32 : i32 to vector<16x128xi32>
    %211 = arith.cmpi eq, %60, %210 : vector<16x128xi32>
    %212 = vector.shape_cast %99 : vector<16x1xf32> to vector<16x1xf32>
    %213 = vector.broadcast %212 : vector<16x1xf32> to vector<16x128xf32>
    %214 = arith.select %211, %213, %209 : vector<16x128xi1>, vector<16x128xf32>
    %c62_i32 = arith.constant 62 : i32
    %215 = vector.broadcast %c62_i32 : i32 to vector<16x128xi32>
    %216 = arith.cmpi eq, %60, %215 : vector<16x128xi32>
    %217 = vector.shape_cast %198 : vector<16x1xf32> to vector<16x1xf32>
    %218 = vector.broadcast %217 : vector<16x1xf32> to vector<16x128xf32>
    %219 = arith.select %216, %218, %214 : vector<16x128xi1>, vector<16x128xf32>
    %c63_i32 = arith.constant 63 : i32
    %220 = vector.broadcast %c63_i32 : i32 to vector<16x128xi32>
    %221 = arith.cmpi eq, %60, %220 : vector<16x128xi32>
    %222 = vector.shape_cast %201 : vector<16x1xf32> to vector<16x1xf32>
    %223 = vector.broadcast %222 : vector<16x1xf32> to vector<16x128xf32>
    %224 = arith.select %221, %223, %219 : vector<16x128xi1>, vector<16x128xf32>
    %c64_i32 = arith.constant 64 : i32
    %225 = vector.broadcast %c64_i32 : i32 to vector<16x128xi32>
    %226 = arith.cmpi eq, %60, %225 : vector<16x128xi32>
    %227 = vector.shape_cast %152 : vector<16x1xf32> to vector<16x1xf32>
    %228 = vector.broadcast %227 : vector<16x1xf32> to vector<16x128xf32>
    %229 = arith.select %226, %228, %224 : vector<16x128xi1>, vector<16x128xf32>
    %c0_81 = arith.constant 0 : index
    %c0_82 = arith.constant 0 : index
    %230 = vector.load %arg13[%c0_81, %c0_82] : memref<16x128xf32, #tpu.memory_space<vmem>>, vector<16x128xf32>
    tpu.vector_store %arg13[%c0_81, %c0_82], %229 {strides = array<i32>} : memref<16x128xf32, #tpu.memory_space<vmem>>, vector<16x128xf32>,
    return
  }
  func.func @transform_0(%arg0: i32) -> (i32, i32) {
    %c0_i32 = arith.constant 0 : i32
    %c0_i32_0 = arith.constant 0 : i32
    return %arg0, %c0_i32 : i32, i32
  }
  func.func @transform_1(%arg0: i32) -> (i32, i32) {
    %c0_i32 = arith.constant 0 : i32
    %c0_i32_0 = arith.constant 0 : i32
    return %arg0, %c0_i32 : i32, i32
  }
  func.func @transform_2(%arg0: i32) -> (i32, i32) {
    %c0_i32 = arith.constant 0 : i32
    %c0_i32_0 = arith.constant 0 : i32
    return %arg0, %c0_i32 : i32, i32
  }
  func.func @transform_3(%arg0: i32) -> (i32, i32) {
    %c0_i32 = arith.constant 0 : i32
    %c0_i32_0 = arith.constant 0 : i32
    %c0_i32_1 = arith.constant 0 : i32
    return %c0_i32, %c0_i32_0 : i32, i32
  }
  func.func @transform_4(%arg0: i32) -> (i32, i32) {
    %c0_i32 = arith.constant 0 : i32
    %c0_i32_0 = arith.constant 0 : i32
    return %arg0, %c0_i32 : i32, i32
  }
  func.func @transform_5(%arg0: i32) -> (i32, i32) {
    %c0_i32 = arith.constant 0 : i32
    %c0_i32_0 = arith.constant 0 : i32
    %c0_i32_1 = arith.constant 0 : i32
    return %c0_i32, %c0_i32_0 : i32, i32
  }
  func.func @transform_6(%arg0: i32) -> (i32, i32) {
    %c0_i32 = arith.constant 0 : i32
    %c0_i32_0 = arith.constant 0 : i32
    %c0_i32_1 = arith.constant 0 : i32
    return %c0_i32, %c0_i32_0 : i32, i32
  }
  func.func @transform_7(%arg0: i32) -> (i32, i32) {
    %c0_i32 = arith.constant 0 : i32
    %c0_i32_0 = arith.constant 0 : i32
    %c0_i32_1 = arith.constant 0 : i32
    return %c0_i32, %c0_i32_0 : i32, i32
  }
  func.func @transform_8(%arg0: i32) -> (i32, i32) {
    %c0_i32 = arith.constant 0 : i32
    %c0_i32_0 = arith.constant 0 : i32
    %c0_i32_1 = arith.constant 0 : i32
    return %c0_i32, %c0_i32_0 : i32, i32
  }
  func.func @transform_9(%arg0: i32) -> (i32, i32) {
    %c0_i32 = arith.constant 0 : i32
    %c0_i32_0 = arith.constant 0 : i32
    %c0_i32_1 = arith.constant 0 : i32
    return %c0_i32, %c0_i32_0 : i32, i32
  }
  func.func @transform_10(%arg0: i32) -> (i32, i32) {
    %c0_i32 = arith.constant 0 : i32
    %c0_i32_0 = arith.constant 0 : i32
    %c0_i32_1 = arith.constant 0 : i32
    return %c0_i32, %c0_i32_0 : i32, i32
  }
  func.func @transform_11(%arg0: i32) -> (i32, i32) {
    %c0_i32 = arith.constant 0 : i32
    %c0_i32_0 = arith.constant 0 : i32
    return %arg0, %c0_i32 : i32, i32
  }
  func.func @transform_12(%arg0: i32) -> (i32, i32) {
    %c0_i32 = arith.constant 0 : i32
    %c0_i32_0 = arith.constant 0 : i32
    return %arg0, %c0_i32 : i32, i32
  }
}

</mosaic_0001>

<llo_original>
// kernel: squeeze.1
$region0: #{squeeze.1}
  %s0 = inlined_call_operand.vmem [shape: f32[16], index: 0, kind: input, shape index: {}]
  %s1 = inlined_call_operand.hbm [shape: f32[2,8], index: 1, kind: output, shape index: {}]
  $region1: #{squeeze.1} parent=0
    #allocation0 [shape = 'u8[1024]{0}', space=vmem, size = 0x400, scoped, tag = 'operand span for operand 1']
    #allocation1 [shape = 's32[1]{0}', space=sflag, size = 0x4, scoped, tag = 'scoped memory for squeeze.1']
    #allocation2 [shape = 'u8[4096]{0}', space=vmem, size = 0x1000, scoped, tag = 'scoped mem for output reshape']
    #allocation3 [shape = 'u8[4096]{0}', space=vmem, size = 0x1000, scoped, tag = 'scoped mem for input reshape']
    %2 = vsyncpa [#allocation1], 0
    %s4 = sshllo.u32 0, 1
    %v5 = vld [vmem:[%s0] sm:%s4]
    %6 = vst [vmem:[#allocation3] sm:%s4] %v5
    %v7 = vld [vmem:[#allocation3] sm:$0x1]
    %vm8 = vcmask 64512
    %9 = vst.msk [vmem:[#allocation2] sm:$0x1] %vm8, %v7
    %v10 = vld [vmem:[#allocation3] sm:$0x1]
    %11 = vrot.lane.b32.xlu0 %v10, 120
    %v12 = vpop.permute.xlu0 %11
    %vm13 = vcmask 64512
    %s14 = scalar_lea.vmem [#allocation2], 1
    %15 = vst.msk [vmem:[%s14] sm:$0x1] %vm13, %v12
    %s17 = sshllo.u32 0, 2
    %v19 = vld [vmem:[#allocation2] sm:%s17]
    %s20 = sshllo.u32 0, 2
    %21 = vst [vmem:[#allocation0] sm:%s20] %v19
    %s23 = ssub.s32 32, 32
    %24 = vsyncadd [#allocation1], %s23
    %s26 = sshll.u32 [#allocation0], 4
    %s27 = int_to_ptr.vmem [resolvable:$true] %s26
    %29 = dma.vmem_to_hbm [thread:$0]  %s27, 32, %s1, [#allocation1]
    %30 = dma.done [#allocation1], 32
    %31 = vsyncpa [#allocation1], 1

// kernel: pdf_decoder_forward.1
$region0: #{pdf_decoder_forward.1}
  #allocation0 [shape = 'u32[]', space=smem, size = 0x4, offset = 0x4, fixed_abs, tag = 'smem constant byte address 0x4 - core index']
  #allocation1 [shape = 'u32[144,128]{1,0:T(1,128)}', space=vmem, size = 0x12000, scoped, tag = 'internal scratch']
  %s0 = inlined_call_operand.vmem [shape: f32[16,16], index: 0, kind: input, shape index: {}]
  %s1 = inlined_call_operand.vmem [shape: f32[16,1], index: 1, kind: input, shape index: {}]
  %s2 = inlined_call_operand.vmem [shape: f32[16,2], index: 2, kind: input, shape index: {}]
  %s3 = inlined_call_operand.vmem [shape: f32[16,8], index: 3, kind: input, shape index: {}]
  %s4 = inlined_call_operand.vmem [shape: f32[16,128], index: 4, kind: input, shape index: {}]
  %s5 = inlined_call_operand.vmem [shape: f32[2,128], index: 5, kind: input, shape index: {}]
  %s6 = inlined_call_operand.vmem [shape: bf16[712,128], index: 6, kind: input, shape index: {}]
  %s7 = inlined_call_operand.hbm [shape: bf16[384,32], index: 7, kind: input, shape index: {}]
  %s8 = inlined_call_operand.vmem [shape: bf16[64,768], index: 8, kind: input, shape index: {}]
  %s9 = inlined_call_operand.vmem [shape: f32[8,128], index: 9, kind: input, shape index: {}]
  %s10 = inlined_call_operand.vmem [shape: f32[8,32], index: 10, kind: input, shape index: {}]
  %s11 = inlined_call_operand.hbm [shape: f32[16,128], index: 11, kind: output, shape index: {0}]
  %s12 = inlined_call_operand.vmem [shape: f32[16,128], index: 12, kind: output, shape index: {1}]
  %13 = xla_tuple %s11, %s12
  %s14 = sld [smem:[#allocation0]]
  $region66: #{pdf_decoder_forward.1} parent=0
    _
  %s16 = ssub.s32 1, %s14
  %s17 = scalar_select 0, %s16, %s14
  $region1: #{pdf_decoder_forward.1} parent=0
    #allocation2 [shape = 'u8[98304]{0}', space=vmem, size = 0x18000, scoped, tag = 'input window, operand 7, single buffered']
    #allocation3 [shape = 's32[1]{0}', space=sflag, size = 0x4, scoped, tag = 'scoped memory for pdf_decoder_forward.1']
    #allocation4 [shape = 's32[1]{0}', space=sflag, size = 0x4, scoped, tag = 'scoped memory for pdf_decoder_forward.1']
    #allocation5 [shape = 'u8[8192]{0}', space=vmem, size = 0x2000, scoped, tag = 'output window, operand 0, single buffered']
    %18 = vsyncpa [#allocation3], 0
    %19 = vsyncpa [#allocation4], 0
    // Predicated region
    $region2: #{pdf_decoder_forward.1} parent=1 // pred_check
      _
    $region3: #{pdf_decoder_forward.1} parent=1 // pred_check_branch
      %21 = sbr.rel (0) target = $region5
    $region4: #{pdf_decoder_forward.1} parent=1 // pred_region
      _
    $region5: #{pdf_decoder_forward.1} parent=1 // pred_fallthru
      _
    // Predicated region
    $region6: #{pdf_decoder_forward.1} parent=1 // pred_check
      _
    $region7: #{pdf_decoder_forward.1} parent=1 // pred_check_branch
      %23 = sbr.rel (0) target = $region9
    $region8: #{pdf_decoder_forward.1} parent=1 // pred_region
      _
    $region9: #{pdf_decoder_forward.1} parent=1 // pred_fallthru
      _
    // Predicated region
    $region10: #{pdf_decoder_forward.1} parent=1 // pred_check
      _
    $region11: #{pdf_decoder_forward.1} parent=1 // pred_check_branch
      %25 = sbr.rel (0) target = $region13
    $region12: #{pdf_decoder_forward.1} parent=1 // pred_region
      _
    $region13: #{pdf_decoder_forward.1} parent=1 // pred_fallthru
      _
    // Predicated region
    $region14: #{pdf_decoder_forward.1} parent=1 // pred_check
      _
    $region15: #{pdf_decoder_forward.1} parent=1 // pred_check_branch
      %27 = sbr.rel (0) target = $region17
    $region16: #{pdf_decoder_forward.1} parent=1 // pred_region
      _
    $region17: #{pdf_decoder_forward.1} parent=1 // pred_fallthru
      _
    // Predicated region
    $region18: #{pdf_decoder_forward.1} parent=1 // pred_check
      _
    $region19: #{pdf_decoder_forward.1} parent=1 // pred_check_branch
      %29 = sbr.rel (0) target = $region21
    $region20: #{pdf_decoder_forward.1} parent=1 // pred_region
      _
    $region21: #{pdf_decoder_forward.1} parent=1 // pred_fallthru
      _
    // Predicated region
    $region22: #{pdf_decoder_forward.1} parent=1 // pred_check
      _
    $region23: #{pdf_decoder_forward.1} parent=1 // pred_check_branch
      %31 = sbr.rel (0) target = $region25
    $region24: #{pdf_decoder_forward.1} parent=1 // pred_region
      _
    $region25: #{pdf_decoder_forward.1} parent=1 // pred_fallthru
      _
    // Predicated region
    $region26: #{pdf_decoder_forward.1} parent=1 // pred_check
      _
    $region27: #{pdf_decoder_forward.1} parent=1 // pred_check_branch
      %33 = sbr.rel (0) target = $region29
    $region28: #{pdf_decoder_forward.1} parent=1 // pred_region
      _
    $region29: #{pdf_decoder_forward.1} parent=1 // pred_fallthru
      _
    // Predicated region
    $region30: #{pdf_decoder_forward.1} parent=1 // pred_check
      _
    $region31: #{pdf_decoder_forward.1} parent=1 // pred_check_branch
      %35 = sbr.rel (0) target = $region33
    $region32: #{pdf_decoder_forward.1} parent=1 // pred_region
      %s37 = ssub.s32 3072, 3072
      %38 = vsyncadd [#allocation3], %s37
      %s39 = sshll.u32 [#allocation2], 4
      %s40 = int_to_ptr.vmem [resolvable:$true] %s39
      %45 = dma.hbm_to_vmem [thread:$0]  %s7, 3072, %s40, [#allocation3], 64, 64, 4
    $region33: #{pdf_decoder_forward.1} parent=1 // pred_fallthru
      _
    // Predicated region
    $region34: #{pdf_decoder_forward.1} parent=1 // pred_check
      _
    $region35: #{pdf_decoder_forward.1} parent=1 // pred_check_branch
      %47 = sbr.rel (0) target = $region37
    $region36: #{pdf_decoder_forward.1} parent=1 // pred_region
      _
    $region37: #{pdf_decoder_forward.1} parent=1 // pred_fallthru
      _
    // Predicated region
    $region38: #{pdf_decoder_forward.1} parent=1 // pred_check
      _
    $region39: #{pdf_decoder_forward.1} parent=1 // pred_check_branch
      %49 = sbr.rel (0) target = $region41
    $region40: #{pdf_decoder_forward.1} parent=1 // pred_region
      _
    $region41: #{pdf_decoder_forward.1} parent=1 // pred_fallthru
      _
    // Predicated region
    $region42: #{pdf_decoder_forward.1} parent=1 // pred_check
      _
    $region43: #{pdf_decoder_forward.1} parent=1 // pred_check_branch
      %51 = sbr.rel (0) target = $region45
    $region44: #{pdf_decoder_forward.1} parent=1 // pred_region
      _
    $region45: #{pdf_decoder_forward.1} parent=1 // pred_fallthru
      _
    // Predicated region
    $region46: #{pdf_decoder_forward.1} parent=1 // pred_check
      _
    $region47: #{pdf_decoder_forward.1} parent=1 // pred_check_branch
      %53 = sbr.rel (0) target = $region49
    $region48: #{pdf_decoder_forward.1} parent=1 // pred_region
      %54 = dma.done [#allocation3], 3072
    $region49: #{pdf_decoder_forward.1} parent=1 // pred_fallthru
      _
    %v56 = vld [vmem:[%s6] sm:$0xf]
    %v57 = vld [vmem:[%s6 + $0x4] sm:$0xf]
    %v58 = vld [vmem:[%s6 + $0x8] sm:$0xf]
    %v59 = vld [vmem:[%s6 + $0xc] sm:$0xf]
    %v60 = vld [vmem:[%s6 + $0x10] sm:$0xf]
    %v61 = vld [vmem:[%s6 + $0x14] sm:$0xf]
    %v62 = vld [vmem:[%s6 + $0x18] sm:$0xf]
    %v63 = vld [vmem:[%s6 + $0x1c] sm:$0xf]
    %v64 = vld [vmem:[%s6 + $0x20] sm:$0xf]
    %v65 = vld [vmem:[%s6 + $0x24] sm:$0xf]
    %v66 = vld [vmem:[%s6 + $0x28] sm:$0xf]
    %v67 = vld [vmem:[%s6 + $0x2c] sm:$0xf]
    %v68 = vld [vmem:[%s6 + $0x30] sm:$0xf]
    %v69 = vld [vmem:[%s6 + $0x34] sm:$0xf]
    %v70 = vld [vmem:[%s6 + $0x38] sm:$0xf]
    %v71 = vld [vmem:[%s6 + $0x3c] sm:$0xf]
    %v72 = vld [vmem:[%s6 + $0x40] sm:$0xf]
    %v73 = vld [vmem:[%s6 + $0x44] sm:$0xf]
    %v74 = vld [vmem:[%s6 + $0x48] sm:$0xf]
    %v75 = vld [vmem:[%s6 + $0x4c] sm:$0xf]
    %v76 = vld [vmem:[%s6 + $0x50] sm:$0xf]
    %v77 = vld [vmem:[%s6 + $0x54] sm:$0xf]
    %v78 = vld [vmem:[%s6 + $0x58] sm:$0xf]
    %v79 = vld [vmem:[%s6 + $0x5c] sm:$0xf]
    %v80 = vld [vmem:[%s6 + $0x60] sm:$0xf]
    %v81 = vld [vmem:[%s6 + $0x64] sm:$0xf]
    %v82 = vld [vmem:[%s6 + $0x68] sm:$0xf]
    %v83 = vld [vmem:[%s6 + $0x6c] sm:$0xf]
    %v84 = vld [vmem:[%s6 + $0x70] sm:$0xf]
    %v85 = vld [vmem:[%s6 + $0x74] sm:$0xf]
    %v86 = vld [vmem:[%s6 + $0x78] sm:$0xf]
    %v87 = vld [vmem:[%s6 + $0x7c] sm:$0xf]
    %v88 = vld [vmem:[%s6 + $0x80] sm:$0xf]
    %v89 = vld [vmem:[%s6 + $0x84] sm:$0xf]
    %v90 = vld [vmem:[%s6 + $0x88] sm:$0xf]
    %v91 = vld [vmem:[%s6 + $0x8c] sm:$0xf]
    %v92 = vld [vmem:[%s6 + $0x90] sm:$0xf]
    %v93 = vld [vmem:[%s6 + $0x94] sm:$0xf]
    %v94 = vld [vmem:[%s6 + $0x98] sm:$0xf]
    %v95 = vld [vmem:[%s6 + $0x9c] sm:$0xf]
    %v96 = vld [vmem:[%s6 + $0xa0] sm:$0xf]
    %v97 = vld [vmem:[%s6 + $0xa4] sm:$0xf]
    %v98 = vld [vmem:[%s6 + $0xa8] sm:$0xf]
    %v99 = vld [vmem:[%s6 + $0xac] sm:$0xf]
    %v100 = vld [vmem:[%s6 + $0xb0] sm:$0xf]
    %v101 = vld [vmem:[%s6 + $0xb4] sm:$0xf]
    %v102 = vld [vmem:[%s6 + $0xb8] sm:$0xf]
    %v103 = vld [vmem:[%s6 + $0xbc] sm:$0xf]
    %v104 = vld [vmem:[%s6 + $0xc0] sm:$0xf]
    %v105 = vld [vmem:[%s6 + $0xc4] sm:$0xf]
    %v106 = vld [vmem:[%s6 + $0xc8] sm:$0xf]
    %v107 = vld [vmem:[%s6 + $0xcc] sm:$0xf]
    %v108 = vld [vmem:[%s6 + $0xd0] sm:$0xf]
    %v109 = vld [vmem:[%s6 + $0xd4] sm:$0xf]
    %v110 = vld [vmem:[%s6 + $0xd8] sm:$0xf]
    %v111 = vld [vmem:[%s6 + $0xdc] sm:$0xf]
    %v112 = vld [vmem:[%s6 + $0xe0] sm:$0xf]
    %v113 = vld [vmem:[%s6 + $0xe4] sm:$0xf]
    %v114 = vld [vmem:[%s6 + $0xe8] sm:$0xf]
    %v115 = vld [vmem:[%s6 + $0xec] sm:$0xf]
    %v116 = vld [vmem:[%s6 + $0xf0] sm:$0xf]
    %v117 = vld [vmem:[%s6 + $0xf4] sm:$0xf]
    %v118 = vld [vmem:[%s6 + $0xf8] sm:$0xf]
    %v119 = vld [vmem:[%s6 + $0xfc] sm:$0xf]
    %v120 = vld [vmem:[%s6 + $0x100] sm:$0xf]
    %v121 = vld [vmem:[%s6 + $0x104] sm:$0xf]
    %v122 = vld [vmem:[%s6 + $0x108] sm:$0xf]
    %v123 = vld [vmem:[%s6 + $0x10c] sm:$0xf]
    %v124 = vld [vmem:[%s6 + $0x110] sm:$0xf]
    %v125 = vld [vmem:[%s6 + $0x114] sm:$0xf]
    %v126 = vld [vmem:[%s6 + $0x118] sm:$0xf]
    %v127 = vld [vmem:[%s6 + $0x11c] sm:$0xf]
    %v128 = vld [vmem:[%s6 + $0x120] sm:$0xf]
    %v129 = vld [vmem:[%s6 + $0x124] sm:$0xf]
    %v130 = vld [vmem:[%s6 + $0x128] sm:$0xf]
    %v131 = vld [vmem:[%s6 + $0x12c] sm:$0xf]
    %v132 = vld [vmem:[%s6 + $0x130] sm:$0xf]
    %v133 = vld [vmem:[%s6 + $0x134] sm:$0xf]
    %v134 = vld [vmem:[%s6 + $0x138] sm:$0xf]
    %v135 = vld [vmem:[%s6 + $0x13c] sm:$0xf]
    %v136 = vld [vmem:[%s6 + $0x140] sm:$0xf]
    %v137 = vld [vmem:[%s6 + $0x144] sm:$0xf]
    %v138 = vld [vmem:[%s6 + $0x148] sm:$0xf]
    %v139 = vld [vmem:[%s6 + $0x14c] sm:$0xf]
    %v140 = vld [vmem:[%s6 + $0x150] sm:$0xf]
    %v141 = vunpack.c.l.bf16 %v137
    %v142 = vunpack.c.l.bf16 %v138
    %v143 = vunpack.c.l.bf16 %v139
    %v144 = vunpack.c.l.bf16 %v140
    %v145 = vld [vmem:[%s6 + $0x154] sm:$0xf]
    %v146 = vld [vmem:[%s6 + $0x158] sm:$0xf]
    %v147 = vld [vmem:[%s6 + $0x15c] sm:$0xf]
    %v148 = vld [vmem:[%s6 + $0x160] sm:$0xf]
    %v149 = vunpack.c.l.bf16 %v145
    %v150 = vunpack.c.l.bf16 %v146
    %v151 = vunpack.c.l.bf16 %v147
    %v152 = vunpack.c.l.bf16 %v148
    %v153 = vld [vmem:[#allocation2] sm:$0xf]
    %v154 = vld [vmem:[#allocation2 + $0x4] sm:$0xf]
    %v155 = vld [vmem:[#allocation2 + $0x8] sm:$0xf]
    %v156 = vld [vmem:[#allocation2 + $0xc] sm:$0xf]
    %v157 = vld [vmem:[#allocation2 + $0x10] sm:$0xf]
    %v158 = vld [vmem:[#allocation2 + $0x14] sm:$0xf]
    %v159 = vld [vmem:[#allocation2 + $0x18] sm:$0xf]
    %v160 = vld [vmem:[#allocation2 + $0x1c] sm:$0xf]
    %v161 = vld [vmem:[#allocation2 + $0x20] sm:$0xf]
    %v162 = vld [vmem:[#allocation2 + $0x24] sm:$0xf]
    %v163 = vld [vmem:[#allocation2 + $0x28] sm:$0xf]
    %v164 = vld [vmem:[#allocation2 + $0x2c] sm:$0xf]
    %v165 = vld [vmem:[#allocation2 + $0x30] sm:$0xf]
    %v166 = vld [vmem:[#allocation2 + $0x34] sm:$0xf]
    %v167 = vld [vmem:[#allocation2 + $0x38] sm:$0xf]
    %v168 = vld [vmem:[#allocation2 + $0x3c] sm:$0xf]
    %v169 = vld [vmem:[#allocation2 + $0x40] sm:$0xf]
    %v170 = vld [vmem:[#allocation2 + $0x44] sm:$0xf]
    %v171 = vld [vmem:[#allocation2 + $0x48] sm:$0xf]
    %v172 = vld [vmem:[#allocation2 + $0x4c] sm:$0xf]
    %v173 = vld [vmem:[#allocation2 + $0x50] sm:$0xf]
    %v174 = vld [vmem:[#allocation2 + $0x54] sm:$0xf]
    %v175 = vld [vmem:[#allocation2 + $0x58] sm:$0xf]
    %v176 = vld [vmem:[#allocation2 + $0x5c] sm:$0xf]
    %v177 = vld [vmem:[#allocation2 + $0x60] sm:$0xf]
    %v178 = vld [vmem:[#allocation2 + $0x64] sm:$0xf]
    %v179 = vld [vmem:[#allocation2 + $0x68] sm:$0xf]
    %v180 = vld [vmem:[#allocation2 + $0x6c] sm:$0xf]
    %v181 = vld [vmem:[#allocation2 + $0x70] sm:$0xf]
    %v182 = vld [vmem:[#allocation2 + $0x74] sm:$0xf]
    %v183 = vld [vmem:[#allocation2 + $0x78] sm:$0xf]
    %v184 = vld [vmem:[#allocation2 + $0x7c] sm:$0xf]
    %v185 = vld [vmem:[#allocation2 + $0x80] sm:$0xf]
    %v186 = vld [vmem:[#allocation2 + $0x84] sm:$0xf]
    %v187 = vld [vmem:[#allocation2 + $0x88] sm:$0xf]
    %v188 = vld [vmem:[#allocation2 + $0x8c] sm:$0xf]
    %v189 = vld [vmem:[#allocation2 + $0x90] sm:$0xf]
    %v190 = vld [vmem:[#allocation2 + $0x94] sm:$0xf]
    %v191 = vld [vmem:[#allocation2 + $0x98] sm:$0xf]
    %v192 = vld [vmem:[#allocation2 + $0x9c] sm:$0xf]
    %v193 = vld [vmem:[#allocation2 + $0xa0] sm:$0xf]
    %v194 = vld [vmem:[#allocation2 + $0xa4] sm:$0xf]
    %v195 = vld [vmem:[#allocation2 + $0xa8] sm:$0xf]
    %v196 = vld [vmem:[#allocation2 + $0xac] sm:$0xf]
    %v197 = vld [vmem:[#allocation2 + $0xb0] sm:$0xf]
    %v198 = vld [vmem:[#allocation2 + $0xb4] sm:$0xf]
    %v199 = vld [vmem:[#allocation2 + $0xb8] sm:$0xf]
    %v200 = vld [vmem:[#allocation2 + $0xbc] sm:$0xf]
    %v201 = vld [vmem:[%s8] sm:$0xff]
    %v202 = vld [vmem:[%s8 + $0x8] sm:$0xff]
    %v203 = vld [vmem:[%s8 + $0x10] sm:$0xff]
    %v204 = vld [vmem:[%s8 + $0x18] sm:$0xff]
    %v205 = vld [vmem:[%s8 + $0x20] sm:$0xff]
    %v206 = vld [vmem:[%s8 + $0x28] sm:$0xff]
    %v207 = vld [vmem:[%s8 + $0x30] sm:$0xff]
    %v208 = vld [vmem:[%s8 + $0x38] sm:$0xff]
    %v209 = vld [vmem:[%s8 + $0x40] sm:$0xff]
    %v210 = vld [vmem:[%s8 + $0x48] sm:$0xff]
    %v211 = vld [vmem:[%s8 + $0x50] sm:$0xff]
    %v212 = vld [vmem:[%s8 + $0x58] sm:$0xff]
    %v213 = vunpack.c.l.bf16 %v201
    %v214 = vunpack.c.h.bf16 %v201
    %v215 = vunpack.c.l.bf16 %v202
    %v216 = vunpack.c.h.bf16 %v202
    %v217 = vunpack.c.l.bf16 %v203
    %v218 = vunpack.c.h.bf16 %v203
    %v219 = vunpack.c.l.bf16 %v204
    %v220 = vunpack.c.h.bf16 %v204
    %v221 = vunpack.c.l.bf16 %v205
    %v222 = vunpack.c.h.bf16 %v205
    %v223 = vunpack.c.l.bf16 %v206
    %v224 = vunpack.c.h.bf16 %v206
    %v225 = vunpack.c.l.bf16 %v207
    %v226 = vunpack.c.h.bf16 %v207
    %v227 = vunpack.c.l.bf16 %v208
    %v228 = vunpack.c.h.bf16 %v208
    %v229 = vunpack.c.l.bf16 %v209
    %v230 = vunpack.c.h.bf16 %v209
    %v231 = vunpack.c.l.bf16 %v210
    %v232 = vunpack.c.h.bf16 %v210
    %v233 = vunpack.c.l.bf16 %v211
    %v234 = vunpack.c.h.bf16 %v211
    %v235 = vunpack.c.l.bf16 %v212
    %v236 = vunpack.c.h.bf16 %v212
    %v237 = vld [vmem:[%s8 + $0x60] sm:$0xff]
    %v238 = vld [vmem:[%s8 + $0x68] sm:$0xff]
    %v239 = vld [vmem:[%s8 + $0x78] sm:$0xff]
    %v240 = vld [vmem:[%s8 + $0x80] sm:$0xff]
    %v241 = vld [vmem:[%s8 + $0x90] sm:$0xff]
    %v242 = vld [vmem:[%s8 + $0x98] sm:$0xff]
    %v243 = vld [vmem:[%s8 + $0xa8] sm:$0xff]
    %v244 = vld [vmem:[%s8 + $0xb0] sm:$0xff]
    %v245 = vunpack.c.l.bf16 %v237
    %v246 = vunpack.c.h.bf16 %v237
    %v247 = vunpack.c.l.bf16 %v238
    %v248 = vunpack.c.h.bf16 %v238
    %v249 = vunpack.c.l.bf16 %v239
    %v250 = vunpack.c.h.bf16 %v239
    %v251 = vunpack.c.l.bf16 %v240
    %v252 = vunpack.c.h.bf16 %v240
    %v253 = vunpack.c.l.bf16 %v241
    %v254 = vunpack.c.h.bf16 %v241
    %v255 = vunpack.c.l.bf16 %v242
    %v256 = vunpack.c.h.bf16 %v242
    %v257 = vunpack.c.l.bf16 %v243
    %v258 = vunpack.c.h.bf16 %v243
    %v259 = vunpack.c.l.bf16 %v244
    %v260 = vunpack.c.h.bf16 %v244
    %v261 = vld [vmem:[%s9] sm:$0x1]
    %v262 = vld [vmem:[%s9 + $0x1] sm:$0x1]
    %v263 = vld [vmem:[%s9 + $0x2] sm:$0x1]
    %v264 = vld [vmem:[%s9 + $0x3] sm:$0x1]
    %v265 = vld [vmem:[%s9 + $0x4] sm:$0x1]
    %v266 = vld [vmem:[%s9 + $0x5] sm:$0x1]
    %v267 = vld [vmem:[%s10] sm:$0x1]
    %v268 = vld [vmem:[%s10 + $0x1] sm:$0x1]
    %v269 = vld [vmem:[%s0] sm:$0xff]
    %v270 = vld [vmem:[%s0 + $0x8] sm:$0xff]
    %v271 = vld [vmem:[%s3] sm:$0xff]
    %v272 = vld [vmem:[%s3 + $0x8] sm:$0xff]
    %v273 = vand.u32 2147483647, %v271
    %v274 = vand.u32 2147483647, %v272
    %vm275 = vcmask 130048
    %v277 = vsel %vm275, %v269, 0
    %v280 = vsel %vm275, %v270, 0
    %282 = vmatprep.subr.mxu0 0.0
    %283 = vmatpush1.msra.mxu0 %v273
    %284 = vmatprep.subr.mxu0 0.0
    %285 = vmatpush1.msra.mxu0 %v274
    %286 = vmatprep.subr.mxu0 0.0
    %287 = vmatpush1.msra.mxu0 0.0
    %288 = vmatprep.subr.mxu0 0.0
    %289 = vmatpush1.msra.mxu0 0.0
    %290 = vmatprep.subr.mxu0 0.0
    %291 = vmatpush1.msra.mxu0 0.0
    %292 = vmatprep.subr.mxu0 0.0
    %293 = vmatpush1.msra.mxu0 0.0
    %294 = vmatprep.subr.mxu0 0.0
    %295 = vmatpush1.msra.mxu0 0.0
    %296 = vmatprep.subr.mxu0 0.0
    %297 = vmatpush1.msra.mxu0 0.0
    %298 = vmatprep.subr.mxu0 0.0
    %299 = vmatpush1.msra.mxu0 0.0
    %300 = vmatprep.subr.mxu0 0.0
    %301 = vmatpush1.msra.mxu0 0.0
    %302 = vmatprep.subr.mxu0 0.0
    %303 = vmatpush1.msra.mxu0 0.0
    %304 = vmatprep.subr.mxu0 0.0
    %305 = vmatpush1.msra.mxu0 0.0
    %306 = vmatprep.subr.mxu0 0.0
    %307 = vmatpush1.msra.mxu0 0.0
    %308 = vmatprep.subr.mxu0 0.0
    %309 = vmatpush1.msra.mxu0 0.0
    %310 = vmatprep.subr.mxu0 0.0
    %311 = vmatpush1.msra.mxu0 0.0
    %312 = vmatprep.subr.mxu0 0.0
    %313 = vmatpush1.msra.mxu0 0.0
    %314 = vmatprep.subr.mxu0 0.0
    %315 = vmatpush1.msra.mxu0 0.0
    %316 = vmatprep.subr.mxu0 0.0
    %317 = vmatpush1.msra.mxu0 0.0
    %318 = vmatprep.subr.mxu0 0.0
    %319 = vmatpush1.msra.mxu0 0.0
    %320 = vmatprep.subr.mxu0 0.0
    %321 = vmatpush1.msra.mxu0 0.0
    %322 = vmatprep.subr.mxu0 0.0
    %323 = vmatpush1.msra.mxu0 0.0
    %324 = vmatprep.subr.mxu0 0.0
    %325 = vmatpush1.msra.mxu0 0.0
    %326 = vmatprep.subr.mxu0 0.0
    %327 = vmatpush1.msra.mxu0 0.0
    %328 = vmatprep.subr.mxu0 0.0
    %329 = vmatpush1.msra.mxu0 0.0
    %330 = vmatprep.subr.mxu0 0.0
    %331 = vmatpush1.msra.mxu0 0.0
    %332 = vmatprep.subr.mxu0 0.0
    %333 = vmatpush1.msra.mxu0 0.0
    %334 = vmatprep.subr.mxu0 0.0
    %335 = vmatpush1.msra.mxu0 0.0
    %336 = vmatprep.subr.mxu0 0.0
    %337 = vmatpush1.msra.mxu0 0.0
    %338 = vmatprep.subr.mxu0 0.0
    %339 = vmatpush1.msra.mxu0 0.0
    %340 = vmatprep.subr.mxu0 0.0
    %341 = vmatpush1.msra.mxu0 0.0
    %342 = vmatprep.subr.mxu0 0.0
    %343 = vmatpush1.msra.mxu0 0.0
    %344 = vmatprep.subr.mxu0 0.0
    %345 = vmatpush1.msra.mxu0 0.0
    %346 = vmatprep.mubr.f32.mxu0 0.0
    %347 = vmatmul.mubr.f32.gmra.mrb[0].mxu0 %v277
    %v348 = vpop.f32.mrb[0].mxu0
    %v349 = vadd.f32 0.0, %v348
    %v350 = vpop.f32.mrb[0].mxu0
    %351 = vmatprep.mubr.f32.mxu0 0.0
    %352 = vmatmul.mubr.f32.gmra.mrb[0].mxu0 %v280
    %v353 = vpop.f32.mrb[0].mxu0
    %v354 = vadd.f32 0.0, %v353
    %v355 = vpop.f32.mrb[0].mxu0
    %356 = vdwg.mxu0
    %v357 = vpack.c.bf16 %v354, %v349
    %v358 = vlaneseq
    %v359 = vshrl.u32 %v358, 7
    %v360 = vsub.s32 0, %v359
    %v361 = vrot.slane %v261, %v360
    %vm362 = vcmask 64512
    %v364 = vsel %vm362, %v357, 0
    %vm366 = vcmask 1043456
    %v368 = vsel %vm366, %v56, 0
    %370 = vmatprep.subr.bf16.mxu0 0
    %371 = vmatpush1.bf16.msra.mxu0 %v368
    %372 = vmatprep.subr.bf16.mxu0 0
    %373 = vmatpush1.bf16.msra.mxu0 0
    %374 = vmatprep.subr.bf16.mxu0 0
    %375 = vmatpush1.bf16.msra.mxu0 0
    %376 = vmatprep.subr.bf16.mxu0 0
    %377 = vmatpush1.bf16.msra.mxu0 0
    %378 = vmatprep.subr.bf16.mxu0 0
    %379 = vmatpush1.bf16.msra.mxu0 0
    %380 = vmatprep.subr.bf16.mxu0 0
    %381 = vmatpush1.bf16.msra.mxu0 0
    %382 = vmatprep.subr.bf16.mxu0 0
    %383 = vmatpush1.bf16.msra.mxu0 0
    %384 = vmatprep.subr.bf16.mxu0 0
    %385 = vmatpush1.bf16.msra.mxu0 0
    %386 = vmatprep.subr.bf16.mxu0 0
    %387 = vmatpush1.bf16.msra.mxu0 0
    %388 = vmatprep.subr.bf16.mxu0 0
    %389 = vmatpush1.bf16.msra.mxu0 0
    %390 = vmatprep.subr.bf16.mxu0 0
    %391 = vmatpush1.bf16.msra.mxu0 0
    %392 = vmatprep.subr.bf16.mxu0 0
    %393 = vmatpush1.bf16.msra.mxu0 0
    %394 = vmatprep.subr.bf16.mxu0 0
    %395 = vmatpush1.bf16.msra.mxu0 0
    %396 = vmatprep.subr.bf16.mxu0 0
    %397 = vmatpush1.bf16.msra.mxu0 0
    %398 = vmatprep.subr.bf16.mxu0 0
    %399 = vmatpush1.bf16.msra.mxu0 0
    %400 = vmatprep.subr.bf16.mxu0 0
    %401 = vmatpush1.bf16.msra.mxu0 0
    %402 = vmatprep.mubr.bf16.mxu0 0
    %403 = vmatmul.mubr.bf16.gmra.mrb[0].mxu0 %v364
    %v404 = vpop.f32.mrb[0].mxu0
    %v405 = vadd.f32 %v361, %v404
    %v406 = vpop.f32.mrb[0].mxu0
    %v407 = vpop.f32.mrb[0].mxu0
    %v408 = vadd.f32 %v361, %v407
    %v409 = vpop.f32.mrb[0].mxu0
    %410 = vdwg.mxu0
    %v411 = vld [vmem:[%s4] sm:$0xff]
    %v412 = vld [vmem:[%s4 + $0x8] sm:$0xff]
    %v413 = vpack.c.bf16 %v412, %v411
    %v414 = vpack.c.bf16 %v408, %v405
    %v431 = vunpack.c.l.b16 %v105
    %v432 = vunpack.c.l.b16 %v106
    %v433 = vunpack.c.l.b16 %v107
    %v434 = vunpack.c.l.b16 %v108
    %v435 = vunpack.c.l.b16 %v109
    %v436 = vunpack.c.l.b16 %v110
    %v437 = vunpack.c.l.b16 %v111
    %v438 = vunpack.c.l.b16 %v112
    %v439 = vunpack.c.l.b16 %v113
    %v440 = vunpack.c.l.b16 %v114
    %v441 = vunpack.c.l.b16 %v115
    %v442 = vunpack.c.l.b16 %v116
    %v443 = vunpack.c.l.b16 %v117
    %v444 = vunpack.c.l.b16 %v118
    %v445 = vunpack.c.l.b16 %v119
    %v446 = vunpack.c.l.b16 %v120
    %v447 = vpack.c.b16 %v432, %v431
    %v448 = vpack.c.b16 %v434, %v433
    %v449 = vpack.c.b16 %v436, %v435
    %v450 = vpack.c.b16 %v438, %v437
    %v451 = vpack.c.b16 %v440, %v439
    %v452 = vpack.c.b16 %v442, %v441
    %v453 = vpack.c.b16 %v444, %v443
    %v454 = vpack.c.b16 %v446, %v445
    %463 = vmatprep.subr.bf16.mxu0 0
    %464 = vmatpush1.bf16.msra.mxu0 %v447
    %465 = vmatprep.subr.bf16.mxu0 0
    %466 = vmatpush1.bf16.msra.mxu0 %v448
    %467 = vmatprep.subr.bf16.mxu0 0
    %468 = vmatpush1.bf16.msra.mxu0 %v449
    %469 = vmatprep.subr.bf16.mxu0 0
    %470 = vmatpush1.bf16.msra.mxu0 %v450
    %471 = vmatprep.subr.bf16.mxu0 0
    %472 = vmatpush1.bf16.msra.mxu0 %v451
    %473 = vmatprep.subr.bf16.mxu0 0
    %474 = vmatpush1.bf16.msra.mxu0 %v452
    %475 = vmatprep.subr.bf16.mxu0 0
    %476 = vmatpush1.bf16.msra.mxu0 %v453
    %477 = vmatprep.subr.bf16.mxu0 0
    %478 = vmatpush1.bf16.msra.mxu0 %v454
    %479 = vmatprep.subr.bf16.mxu0 0
    %480 = vmatpush1.bf16.msra.mxu0 0
    %481 = vmatprep.subr.bf16.mxu0 0
    %482 = vmatpush1.bf16.msra.mxu0 0
    %483 = vmatprep.subr.bf16.mxu0 0
    %484 = vmatpush1.bf16.msra.mxu0 0
    %485 = vmatprep.subr.bf16.mxu0 0
    %486 = vmatpush1.bf16.msra.mxu0 0
    %487 = vmatprep.subr.bf16.mxu0 0
    %488 = vmatpush1.bf16.msra.mxu0 0
    %489 = vmatprep.subr.bf16.mxu0 0
    %490 = vmatpush1.bf16.msra.mxu0 0
    %491 = vmatprep.subr.bf16.mxu0 0
    %492 = vmatpush1.bf16.msra.mxu0 0
    %493 = vmatprep.subr.bf16.mxu0 0
    %494 = vmatpush1.bf16.msra.mxu0 0
    %495 = vmatprep.mubr.bf16.mxu0 0
    %496 = vmatmul.mubr.bf16.gmra.mrb[0].mxu0 %v414
    %v497 = vpop.f32.mrb[0].mxu0
    %v498 = vadd.f32 0.0, %v497
    %v499 = vpop.f32.mrb[0].mxu0
    %v500 = vpop.f32.mrb[0].mxu0
    %v501 = vadd.f32 0.0, %v500
    %v502 = vpop.f32.mrb[0].mxu0
    %503 = vdwg.mxu0
    %v520 = vunpack.c.l.b16 %v57
    %v521 = vunpack.c.l.b16 %v58
    %v522 = vunpack.c.l.b16 %v59
    %v523 = vunpack.c.l.b16 %v60
    %v524 = vunpack.c.l.b16 %v61
    %v525 = vunpack.c.l.b16 %v62
    %v526 = vunpack.c.l.b16 %v63
    %v527 = vunpack.c.l.b16 %v64
    %v528 = vunpack.c.l.b16 %v65
    %v529 = vunpack.c.l.b16 %v66
    %v530 = vunpack.c.l.b16 %v67
    %v531 = vunpack.c.l.b16 %v68
    %v532 = vunpack.c.l.b16 %v69
    %v533 = vunpack.c.l.b16 %v70
    %v534 = vunpack.c.l.b16 %v71
    %v535 = vunpack.c.l.b16 %v72
    %v536 = vpack.c.b16 %v521, %v520
    %v537 = vpack.c.b16 %v523, %v522
    %v538 = vpack.c.b16 %v525, %v524
    %v539 = vpack.c.b16 %v527, %v526
    %v540 = vpack.c.b16 %v529, %v528
    %v541 = vpack.c.b16 %v531, %v530
    %v542 = vpack.c.b16 %v533, %v532
    %v543 = vpack.c.b16 %v535, %v534
    %552 = vmatprep.subr.bf16.mxu0 0
    %553 = vmatpush1.bf16.msra.mxu0 %v536
    %554 = vmatprep.subr.bf16.mxu0 0
    %555 = vmatpush1.bf16.msra.mxu0 %v537
    %556 = vmatprep.subr.bf16.mxu0 0
    %557 = vmatpush1.bf16.msra.mxu0 %v538
    %558 = vmatprep.subr.bf16.mxu0 0
    %559 = vmatpush1.bf16.msra.mxu0 %v539
    %560 = vmatprep.subr.bf16.mxu0 0
    %561 = vmatpush1.bf16.msra.mxu0 %v540
    %562 = vmatprep.subr.bf16.mxu0 0
    %563 = vmatpush1.bf16.msra.mxu0 %v541
    %564 = vmatprep.subr.bf16.mxu0 0
    %565 = vmatpush1.bf16.msra.mxu0 %v542
    %566 = vmatprep.subr.bf16.mxu0 0
    %567 = vmatpush1.bf16.msra.mxu0 %v543
    %568 = vmatprep.subr.bf16.mxu0 0
    %569 = vmatpush1.bf16.msra.mxu0 0
    %570 = vmatprep.subr.bf16.mxu0 0
    %571 = vmatpush1.bf16.msra.mxu0 0
    %572 = vmatprep.subr.bf16.mxu0 0
    %573 = vmatpush1.bf16.msra.mxu0 0
    %574 = vmatprep.subr.bf16.mxu0 0
    %575 = vmatpush1.bf16.msra.mxu0 0
    %576 = vmatprep.subr.bf16.mxu0 0
    %577 = vmatpush1.bf16.msra.mxu0 0
    %578 = vmatprep.subr.bf16.mxu0 0
    %579 = vmatpush1.bf16.msra.mxu0 0
    %580 = vmatprep.subr.bf16.mxu0 0
    %581 = vmatpush1.bf16.msra.mxu0 0
    %582 = vmatprep.subr.bf16.mxu0 0
    %583 = vmatpush1.bf16.msra.mxu0 0
    %584 = vmatprep.mubr.bf16.mxu0 0
    %585 = vmatmul.mubr.bf16.gmra.mrb[0].mxu0 %v413
    %v586 = vpop.f32.mrb[0].mxu0
    %v587 = vadd.f32 %v498, %v586
    %v588 = vpop.f32.mrb[0].mxu0
    %v589 = vpop.f32.mrb[0].mxu0
    %v590 = vadd.f32 %v501, %v589
    %v591 = vpop.f32.mrb[0].mxu0
    %592 = vdwg.mxu0
    %v593 = vlaneseq
    %v594 = vshrl.u32 %v593, 7
    %v595 = vsub.s32 0, %v594
    %v596 = vrot.slane %v262, %v595
    %v597 = vadd.f32 %v587, %v596
    %v598 = vadd.f32 %v590, %v596
    %v615 = vunpack.c.l.b16 %v121
    %v616 = vunpack.c.l.b16 %v122
    %v617 = vunpack.c.l.b16 %v123
    %v618 = vunpack.c.l.b16 %v124
    %v619 = vunpack.c.l.b16 %v125
    %v620 = vunpack.c.l.b16 %v126
    %v621 = vunpack.c.l.b16 %v127
    %v622 = vunpack.c.l.b16 %v128
    %v623 = vunpack.c.l.b16 %v129
    %v624 = vunpack.c.l.b16 %v130
    %v625 = vunpack.c.l.b16 %v131
    %v626 = vunpack.c.l.b16 %v132
    %v627 = vunpack.c.l.b16 %v133
    %v628 = vunpack.c.l.b16 %v134
    %v629 = vunpack.c.l.b16 %v135
    %v630 = vunpack.c.l.b16 %v136
    %v631 = vpack.c.b16 %v616, %v615
    %v632 = vpack.c.b16 %v618, %v617
    %v633 = vpack.c.b16 %v620, %v619
    %v634 = vpack.c.b16 %v622, %v621
    %v635 = vpack.c.b16 %v624, %v623
    %v636 = vpack.c.b16 %v626, %v625
    %v637 = vpack.c.b16 %v628, %v627
    %v638 = vpack.c.b16 %v630, %v629
    %647 = vmatprep.subr.bf16.mxu0 0
    %648 = vmatpush1.bf16.msra.mxu0 %v631
    %649 = vmatprep.subr.bf16.mxu0 0
    %650 = vmatpush1.bf16.msra.mxu0 %v632
    %651 = vmatprep.subr.bf16.mxu0 0
    %652 = vmatpush1.bf16.msra.mxu0 %v633
    %653 = vmatprep.subr.bf16.mxu0 0
    %654 = vmatpush1.bf16.msra.mxu0 %v634
    %655 = vmatprep.subr.bf16.mxu0 0
    %656 = vmatpush1.bf16.msra.mxu0 %v635
    %657 = vmatprep.subr.bf16.mxu0 0
    %658 = vmatpush1.bf16.msra.mxu0 %v636
    %659 = vmatprep.subr.bf16.mxu0 0
    %660 = vmatpush1.bf16.msra.mxu0 %v637
    %661 = vmatprep.subr.bf16.mxu0 0
    %662 = vmatpush1.bf16.msra.mxu0 %v638
    %663 = vmatprep.subr.bf16.mxu0 0
    %664 = vmatpush1.bf16.msra.mxu0 0
    %665 = vmatprep.subr.bf16.mxu0 0
    %666 = vmatpush1.bf16.msra.mxu0 0
    %667 = vmatprep.subr.bf16.mxu0 0
    %668 = vmatpush1.bf16.msra.mxu0 0
    %669 = vmatprep.subr.bf16.mxu0 0
    %670 = vmatpush1.bf16.msra.mxu0 0
    %671 = vmatprep.subr.bf16.mxu0 0
    %672 = vmatpush1.bf16.msra.mxu0 0
    %673 = vmatprep.subr.bf16.mxu0 0
    %674 = vmatpush1.bf16.msra.mxu0 0
    %675 = vmatprep.subr.bf16.mxu0 0
    %676 = vmatpush1.bf16.msra.mxu0 0
    %677 = vmatprep.subr.bf16.mxu0 0
    %678 = vmatpush1.bf16.msra.mxu0 0
    %679 = vmatprep.mubr.bf16.mxu0 0
    %680 = vmatmul.mubr.bf16.gmra.mrb[0].mxu0 %v414
    %v681 = vpop.f32.mrb[0].mxu0
    %v682 = vadd.f32 0.0, %v681
    %v683 = vpop.f32.mrb[0].mxu0
    %v684 = vpop.f32.mrb[0].mxu0
    %v685 = vadd.f32 0.0, %v684
    %v686 = vpop.f32.mrb[0].mxu0
    %687 = vdwg.mxu0
    %v704 = vunpack.c.l.b16 %v73
    %v705 = vunpack.c.l.b16 %v74
    %v706 = vunpack.c.l.b16 %v75
    %v707 = vunpack.c.l.b16 %v76
    %v708 = vunpack.c.l.b16 %v77
    %v709 = vunpack.c.l.b16 %v78
    %v710 = vunpack.c.l.b16 %v79
    %v711 = vunpack.c.l.b16 %v80
    %v712 = vunpack.c.l.b16 %v81
    %v713 = vunpack.c.l.b16 %v82
    %v714 = vunpack.c.l.b16 %v83
    %v715 = vunpack.c.l.b16 %v84
    %v716 = vunpack.c.l.b16 %v85
    %v717 = vunpack.c.l.b16 %v86
    %v718 = vunpack.c.l.b16 %v87
    %v719 = vunpack.c.l.b16 %v88
    %v720 = vpack.c.b16 %v705, %v704
    %v721 = vpack.c.b16 %v707, %v706
    %v722 = vpack.c.b16 %v709, %v708
    %v723 = vpack.c.b16 %v711, %v710
    %v724 = vpack.c.b16 %v713, %v712
    %v725 = vpack.c.b16 %v715, %v714
    %v726 = vpack.c.b16 %v717, %v716
    %v727 = vpack.c.b16 %v719, %v718
    %736 = vmatprep.subr.bf16.mxu0 0
    %737 = vmatpush1.bf16.msra.mxu0 %v720
    %738 = vmatprep.subr.bf16.mxu0 0
    %739 = vmatpush1.bf16.msra.mxu0 %v721
    %740 = vmatprep.subr.bf16.mxu0 0
    %741 = vmatpush1.bf16.msra.mxu0 %v722
    %742 = vmatprep.subr.bf16.mxu0 0
    %743 = vmatpush1.bf16.msra.mxu0 %v723
    %744 = vmatprep.subr.bf16.mxu0 0
    %745 = vmatpush1.bf16.msra.mxu0 %v724
    %746 = vmatprep.subr.bf16.mxu0 0
    %747 = vmatpush1.bf16.msra.mxu0 %v725
    %748 = vmatprep.subr.bf16.mxu0 0
    %749 = vmatpush1.bf16.msra.mxu0 %v726
    %750 = vmatprep.subr.bf16.mxu0 0
    %751 = vmatpush1.bf16.msra.mxu0 %v727
    %752 = vmatprep.subr.bf16.mxu0 0
    %753 = vmatpush1.bf16.msra.mxu0 0
    %754 = vmatprep.subr.bf16.mxu0 0
    %755 = vmatpush1.bf16.msra.mxu0 0
    %756 = vmatprep.subr.bf16.mxu0 0
    %757 = vmatpush1.bf16.msra.mxu0 0
    %758 = vmatprep.subr.bf16.mxu0 0
    %759 = vmatpush1.bf16.msra.mxu0 0
    %760 = vmatprep.subr.bf16.mxu0 0
    %761 = vmatpush1.bf16.msra.mxu0 0
    %762 = vmatprep.subr.bf16.mxu0 0
    %763 = vmatpush1.bf16.msra.mxu0 0
    %764 = vmatprep.subr.bf16.mxu0 0
    %765 = vmatpush1.bf16.msra.mxu0 0
    %766 = vmatprep.subr.bf16.mxu0 0
    %767 = vmatpush1.bf16.msra.mxu0 0
    %768 = vmatprep.mubr.bf16.mxu0 0
    %769 = vmatmul.mubr.bf16.gmra.mrb[0].mxu0 %v413
    %v770 = vpop.f32.mrb[0].mxu0
    %v771 = vadd.f32 %v682, %v770
    %v772 = vpop.f32.mrb[0].mxu0
    %v773 = vpop.f32.mrb[0].mxu0
    %v774 = vadd.f32 %v685, %v773
    %v775 = vpop.f32.mrb[0].mxu0
    %776 = vdwg.mxu0
    %v777 = vld [vmem:[%s2] sm:$0xff]
    %v778 = vld [vmem:[%s2 + $0x8] sm:$0xff]
    %v779 = vld [vmem:[%s5] sm:$0x3]
    %vm780 = vcmask 15360
    %v782 = vsel %vm780, %v777, 0
    %v785 = vsel %vm780, %v778, 0
    %vm787 = vcmask 1041408
    %v789 = vsel %vm787, %v779, 0
    %791 = vmatprep.subr.mxu0 0.0
    %792 = vmatpush1.msra.mxu0 %v789
    %793 = vmatprep.subr.mxu0 0.0
    %794 = vmatpush1.msra.mxu0 0.0
    %795 = vmatprep.subr.mxu0 0.0
    %796 = vmatpush1.msra.mxu0 0.0
    %797 = vmatprep.subr.mxu0 0.0
    %798 = vmatpush1.msra.mxu0 0.0
    %799 = vmatprep.subr.mxu0 0.0
    %800 = vmatpush1.msra.mxu0 0.0
    %801 = vmatprep.subr.mxu0 0.0
    %802 = vmatpush1.msra.mxu0 0.0
    %803 = vmatprep.subr.mxu0 0.0
    %804 = vmatpush1.msra.mxu0 0.0
    %805 = vmatprep.subr.mxu0 0.0
    %806 = vmatpush1.msra.mxu0 0.0
    %807 = vmatprep.subr.mxu0 0.0
    %808 = vmatpush1.msra.mxu0 0.0
    %809 = vmatprep.subr.mxu0 0.0
    %810 = vmatpush1.msra.mxu0 0.0
    %811 = vmatprep.subr.mxu0 0.0
    %812 = vmatpush1.msra.mxu0 0.0
    %813 = vmatprep.subr.mxu0 0.0
    %814 = vmatpush1.msra.mxu0 0.0
    %815 = vmatprep.subr.mxu0 0.0
    %816 = vmatpush1.msra.mxu0 0.0
    %817 = vmatprep.subr.mxu0 0.0
    %818 = vmatpush1.msra.mxu0 0.0
    %819 = vmatprep.subr.mxu0 0.0
    %820 = vmatpush1.msra.mxu0 0.0
    %821 = vmatprep.subr.mxu0 0.0
    %822 = vmatpush1.msra.mxu0 0.0
    %823 = vmatprep.subr.mxu0 0.0
    %824 = vmatpush1.msra.mxu0 0.0
    %825 = vmatprep.subr.mxu0 0.0
    %826 = vmatpush1.msra.mxu0 0.0
    %827 = vmatprep.subr.mxu0 0.0
    %828 = vmatpush1.msra.mxu0 0.0
    %829 = vmatprep.subr.mxu0 0.0
    %830 = vmatpush1.msra.mxu0 0.0
    %831 = vmatprep.subr.mxu0 0.0
    %832 = vmatpush1.msra.mxu0 0.0
    %833 = vmatprep.subr.mxu0 0.0
    %834 = vmatpush1.msra.mxu0 0.0
    %835 = vmatprep.subr.mxu0 0.0
    %836 = vmatpush1.msra.mxu0 0.0
    %837 = vmatprep.subr.mxu0 0.0
    %838 = vmatpush1.msra.mxu0 0.0
    %839 = vmatprep.subr.mxu0 0.0
    %840 = vmatpush1.msra.mxu0 0.0
    %841 = vmatprep.subr.mxu0 0.0
    %842 = vmatpush1.msra.mxu0 0.0
    %843 = vmatprep.subr.mxu0 0.0
    %844 = vmatpush1.msra.mxu0 0.0
    %845 = vmatprep.subr.mxu0 0.0
    %846 = vmatpush1.msra.mxu0 0.0
    %847 = vmatprep.subr.mxu0 0.0
    %848 = vmatpush1.msra.mxu0 0.0
    %849 = vmatprep.subr.mxu0 0.0
    %850 = vmatpush1.msra.mxu0 0.0
    %851 = vmatprep.subr.mxu0 0.0
    %852 = vmatpush1.msra.mxu0 0.0
    %853 = vmatprep.subr.mxu0 0.0
    %854 = vmatpush1.msra.mxu0 0.0
    %855 = vmatprep.mubr.f32.mxu0 0.0
    %856 = vmatmul.mubr.f32.gmra.mrb[0].mxu0 %v782
    %v857 = vpop.f32.mrb[0].mxu0
    %v858 = vadd.f32 0.0, %v857
    %v859 = vpop.f32.mrb[0].mxu0
    %860 = vmatprep.mubr.f32.mxu0 0.0
    %861 = vmatmul.mubr.f32.gmra.mrb[0].mxu0 %v785
    %v862 = vpop.f32.mrb[0].mxu0
    %v863 = vadd.f32 0.0, %v862
    %v864 = vpop.f32.mrb[0].mxu0
    %865 = vdwg.mxu0
    %v866 = vld [vmem:[%s1] sm:$0xff]
    %v867 = vld [vmem:[%s1 + $0x8] sm:$0xff]
    %vm868 = vcmp.gt.f32.partialorder %v866, 0.5
    %vm869 = vcmp.gt.f32.partialorder %v867, 0.5
    %v870 = vsel %vm868, 1, 0
    %v871 = vsel %vm869, 1, 0
    %872 = vset.pattern.permute.xlu0 0
    %873 = vperm.xlu0 %872, %v870
    %v874 = vpop.permute.xlu0 %873
    %875 = vset.pattern.permute.xlu0 0
    %876 = vperm.xlu0 %875, %v871
    %v877 = vpop.permute.xlu0 %876
    %vm878 = vcmp.eq.s32.totalorder %v874, 1
    %vm879 = vcmp.eq.s32.totalorder %v877, 1
    %v880 = vsel %vm878, %v771, %v597
    %v881 = vsel %vm879, %v774, %v598
    %v882 = vpack.c.bf16 %v863, %v858
    %v899 = vunpack.c.l.b16 %v89
    %v900 = vunpack.c.l.b16 %v90
    %v901 = vunpack.c.l.b16 %v91
    %v902 = vunpack.c.l.b16 %v92
    %v903 = vunpack.c.l.b16 %v93
    %v904 = vunpack.c.l.b16 %v94
    %v905 = vunpack.c.l.b16 %v95
    %v906 = vunpack.c.l.b16 %v96
    %v907 = vunpack.c.l.b16 %v97
    %v908 = vunpack.c.l.b16 %v98
    %v909 = vunpack.c.l.b16 %v99
    %v910 = vunpack.c.l.b16 %v100
    %v911 = vunpack.c.l.b16 %v101
    %v912 = vunpack.c.l.b16 %v102
    %v913 = vunpack.c.l.b16 %v103
    %v914 = vunpack.c.l.b16 %v104
    %v915 = vpack.c.b16 %v900, %v899
    %v916 = vpack.c.b16 %v902, %v901
    %v917 = vpack.c.b16 %v904, %v903
    %v918 = vpack.c.b16 %v906, %v905
    %v919 = vpack.c.b16 %v908, %v907
    %v920 = vpack.c.b16 %v910, %v909
    %v921 = vpack.c.b16 %v912, %v911
    %v922 = vpack.c.b16 %v914, %v913
    %931 = vmatprep.subr.bf16.mxu0 0
    %932 = vmatpush1.bf16.msra.mxu0 %v915
    %933 = vmatprep.subr.bf16.mxu0 0
    %934 = vmatpush1.bf16.msra.mxu0 %v916
    %935 = vmatprep.subr.bf16.mxu0 0
    %936 = vmatpush1.bf16.msra.mxu0 %v917
    %937 = vmatprep.subr.bf16.mxu0 0
    %938 = vmatpush1.bf16.msra.mxu0 %v918
    %939 = vmatprep.subr.bf16.mxu0 0
    %940 = vmatpush1.bf16.msra.mxu0 %v919
    %941 = vmatprep.subr.bf16.mxu0 0
    %942 = vmatpush1.bf16.msra.mxu0 %v920
    %943 = vmatprep.subr.bf16.mxu0 0
    %944 = vmatpush1.bf16.msra.mxu0 %v921
    %945 = vmatprep.subr.bf16.mxu0 0
    %946 = vmatpush1.bf16.msra.mxu0 %v922
    %947 = vmatprep.subr.bf16.mxu0 0
    %948 = vmatpush1.bf16.msra.mxu0 0
    %949 = vmatprep.subr.bf16.mxu0 0
    %950 = vmatpush1.bf16.msra.mxu0 0
    %951 = vmatprep.subr.bf16.mxu0 0
    %952 = vmatpush1.bf16.msra.mxu0 0
    %953 = vmatprep.subr.bf16.mxu0 0
    %954 = vmatpush1.bf16.msra.mxu0 0
    %955 = vmatprep.subr.bf16.mxu0 0
    %956 = vmatpush1.bf16.msra.mxu0 0
    %957 = vmatprep.subr.bf16.mxu0 0
    %958 = vmatpush1.bf16.msra.mxu0 0
    %959 = vmatprep.subr.bf16.mxu0 0
    %960 = vmatpush1.bf16.msra.mxu0 0
    %961 = vmatprep.subr.bf16.mxu0 0
    %962 = vmatpush1.bf16.msra.mxu0 0
    %963 = vmatprep.mubr.bf16.mxu0 0
    %964 = vmatmul.mubr.bf16.gmra.mrb[0].mxu0 %v882
    %v965 = vpop.f32.mrb[0].mxu0
    %v966 = vadd.f32 0.0, %v965
    %v967 = vpop.f32.mrb[0].mxu0
    %v968 = vpop.f32.mrb[0].mxu0
    %v969 = vadd.f32 0.0, %v968
    %v970 = vpop.f32.mrb[0].mxu0
    %971 = vdwg.mxu0
    %v972 = vadd.f32 %v880, %v966
    %v973 = vadd.f32 %v881, %v969
    %v974 = vlaneseq
    %v975 = vshrl.u32 %v974, 7
    %v976 = vsub.s32 0, %v975
    %v977 = vrot.slane %v263, %v976
    %v978 = vadd.f32 %v972, %v977
    %v979 = vadd.f32 %v973, %v977
    %980 = vst [vmem:[#allocation5] sm:$0xff] %v978
    %981 = vst [vmem:[#allocation5 + $0x8] sm:$0xff] %v979
    %v982 = vpack.c.bf16 %v979, %v978
    %v983 = vlaneseq
    %v984 = vand.u32 %v983, 127
    %vm985 = vcmp.lt.s32.totalorder %v984, 5
    %v986 = vlaneseq
    %v987 = vshrl.u32 %v986, 7
    %v988 = vsub.s32 0, %v987
    %v989 = vrot.slane %v267, %v988
    %v1006 = vunpack.c.l.b16 %v153
    %v1007 = vunpack.c.l.b16 %v154
    %v1008 = vunpack.c.l.b16 %v155
    %v1009 = vunpack.c.l.b16 %v156
    %v1010 = vunpack.c.l.b16 %v157
    %v1011 = vunpack.c.l.b16 %v158
    %v1012 = vunpack.c.l.b16 %v159
    %v1013 = vunpack.c.l.b16 %v160
    %v1014 = vunpack.c.l.b16 %v161
    %v1015 = vunpack.c.l.b16 %v162
    %v1016 = vunpack.c.l.b16 %v163
    %v1017 = vunpack.c.l.b16 %v164
    %v1018 = vunpack.c.l.b16 %v165
    %v1019 = vunpack.c.l.b16 %v166
    %v1020 = vunpack.c.l.b16 %v167
    %v1021 = vunpack.c.l.b16 %v168
    %v1022 = vpack.c.b16 %v1007, %v1006
    %v1023 = vpack.c.b16 %v1009, %v1008
    %v1024 = vpack.c.b16 %v1011, %v1010
    %v1025 = vpack.c.b16 %v1013, %v1012
    %v1026 = vpack.c.b16 %v1015, %v1014
    %v1027 = vpack.c.b16 %v1017, %v1016
    %v1028 = vpack.c.b16 %v1019, %v1018
    %v1029 = vpack.c.b16 %v1021, %v1020
    %1038 = vmatprep.subr.bf16.mxu0 0
    %1039 = vmatpush1.bf16.msra.mxu0 %v1022
    %1040 = vmatprep.subr.bf16.mxu0 0
    %1041 = vmatpush1.bf16.msra.mxu0 %v1023
    %1042 = vmatprep.subr.bf16.mxu0 0
    %1043 = vmatpush1.bf16.msra.mxu0 %v1024
    %1044 = vmatprep.subr.bf16.mxu0 0
    %1045 = vmatpush1.bf16.msra.mxu0 %v1025
    %1046 = vmatprep.subr.bf16.mxu0 0
    %1047 = vmatpush1.bf16.msra.mxu0 %v1026
    %1048 = vmatprep.subr.bf16.mxu0 0
    %1049 = vmatpush1.bf16.msra.mxu0 %v1027
    %1050 = vmatprep.subr.bf16.mxu0 0
    %1051 = vmatpush1.bf16.msra.mxu0 %v1028
    %1052 = vmatprep.subr.bf16.mxu0 0
    %1053 = vmatpush1.bf16.msra.mxu0 %v1029
    %1054 = vmatprep.subr.bf16.mxu0 0
    %1055 = vmatpush1.bf16.msra.mxu0 0
    %1056 = vmatprep.subr.bf16.mxu0 0
    %1057 = vmatpush1.bf16.msra.mxu0 0
    %1058 = vmatprep.subr.bf16.mxu0 0
    %1059 = vmatpush1.bf16.msra.mxu0 0
    %1060 = vmatprep.subr.bf16.mxu0 0
    %1061 = vmatpush1.bf16.msra.mxu0 0
    %1062 = vmatprep.subr.bf16.mxu0 0
    %1063 = vmatpush1.bf16.msra.mxu0 0
    %1064 = vmatprep.subr.bf16.mxu0 0
    %1065 = vmatpush1.bf16.msra.mxu0 0
    %1066 = vmatprep.subr.bf16.mxu0 0
    %1067 = vmatpush1.bf16.msra.mxu0 0
    %1068 = vmatprep.subr.bf16.mxu0 0
    %1069 = vmatpush1.bf16.msra.mxu0 0
    %1070 = vmatprep.mubr.bf16.mxu0 0
    %1071 = vmatmul.mubr.bf16.gmra.mrb[0].mxu0 %v982
    %v1072 = vpop.f32.mrb[0].mxu0
    %v1073 = vadd.f32 %v989, %v1072
    %v1074 = vpop.f32.mrb[0].mxu0
    %v1075 = vpop.f32.mrb[0].mxu0
    %v1076 = vadd.f32 %v989, %v1075
    %v1077 = vpop.f32.mrb[0].mxu0
    %1078 = vdwg.mxu0
    %vm1079 = vcmask 261120
    %v1081 = vsel %vm1079, %v1073, 0
    %v1084 = vsel %vm1079, %v1076, 0
    %1086 = vmatprep.subr.mxu0 %v214
    %1087 = vmatpush1.msra.mxu0 %v213
    %1088 = vmatprep.subr.mxu0 %v220
    %1089 = vmatpush1.msra.mxu0 %v219
    %1090 = vmatprep.subr.mxu0 %v226
    %1091 = vmatpush1.msra.mxu0 %v225
    %1092 = vmatprep.subr.mxu0 %v232
    %1093 = vmatpush1.msra.mxu0 %v231
    %1094 = vmatprep.subr.mxu0 0.0
    %1095 = vmatpush1.msra.mxu0 0.0
    %1096 = vmatprep.subr.mxu0 0.0
    %1097 = vmatpush1.msra.mxu0 0.0
    %1098 = vmatprep.subr.mxu0 0.0
    %1099 = vmatpush1.msra.mxu0 0.0
    %1100 = vmatprep.subr.mxu0 0.0
    %1101 = vmatpush1.msra.mxu0 0.0
    %1102 = vmatprep.subr.mxu0 0.0
    %1103 = vmatpush1.msra.mxu0 0.0
    %1104 = vmatprep.subr.mxu0 0.0
    %1105 = vmatpush1.msra.mxu0 0.0
    %1106 = vmatprep.subr.mxu0 0.0
    %1107 = vmatpush1.msra.mxu0 0.0
    %1108 = vmatprep.subr.mxu0 0.0
    %1109 = vmatpush1.msra.mxu0 0.0
    %1110 = vmatprep.subr.mxu0 0.0
    %1111 = vmatpush1.msra.mxu0 0.0
    %1112 = vmatprep.subr.mxu0 0.0
    %1113 = vmatpush1.msra.mxu0 0.0
    %1114 = vmatprep.subr.mxu0 0.0
    %1115 = vmatpush1.msra.mxu0 0.0
    %1116 = vmatprep.subr.mxu0 0.0
    %1117 = vmatpush1.msra.mxu0 0.0
    %1118 = vmatprep.subr.mxu0 0.0
    %1119 = vmatpush1.msra.mxu0 0.0
    %1120 = vmatprep.subr.mxu0 0.0
    %1121 = vmatpush1.msra.mxu0 0.0
    %1122 = vmatprep.subr.mxu0 0.0
    %1123 = vmatpush1.msra.mxu0 0.0
    %1124 = vmatprep.subr.mxu0 0.0
    %1125 = vmatpush1.msra.mxu0 0.0
    %1126 = vmatprep.subr.mxu0 0.0
    %1127 = vmatpush1.msra.mxu0 0.0
    %1128 = vmatprep.subr.mxu0 0.0
    %1129 = vmatpush1.msra.mxu0 0.0
    %1130 = vmatprep.subr.mxu0 0.0
    %1131 = vmatpush1.msra.mxu0 0.0
    %1132 = vmatprep.subr.mxu0 0.0
    %1133 = vmatpush1.msra.mxu0 0.0
    %1134 = vmatprep.subr.mxu0 0.0
    %1135 = vmatpush1.msra.mxu0 0.0
    %1136 = vmatprep.subr.mxu0 0.0
    %1137 = vmatpush1.msra.mxu0 0.0
    %1138 = vmatprep.subr.mxu0 0.0
    %1139 = vmatpush1.msra.mxu0 0.0
    %1140 = vmatprep.subr.mxu0 0.0
    %1141 = vmatpush1.msra.mxu0 0.0
    %1142 = vmatprep.subr.mxu0 0.0
    %1143 = vmatpush1.msra.mxu0 0.0
    %1144 = vmatprep.subr.mxu0 0.0
    %1145 = vmatpush1.msra.mxu0 0.0
    %1146 = vmatprep.subr.mxu0 0.0
    %1147 = vmatpush1.msra.mxu0 0.0
    %1148 = vmatprep.subr.mxu0 0.0
    %1149 = vmatpush1.msra.mxu0 0.0
    %1150 = vmatprep.mubr.f32.mxu0 0.0
    %1151 = vmatmul.mubr.f32.gmra.mrb[0].mxu0 %v1081
    %v1152 = vpop.f32.mrb[0].mxu0
    %v1153 = vadd.f32 0.0, %v1152
    %v1154 = vpop.f32.mrb[0].mxu0
    %v1155 = vadd.f32 0.0, %v1154
    %1156 = vmatprep.mubr.f32.mxu0 0.0
    %1157 = vmatmul.mubr.f32.gmra.mrb[0].mxu0 %v1084
    %v1158 = vpop.f32.mrb[0].mxu0
    %v1159 = vadd.f32 0.0, %v1158
    %v1160 = vpop.f32.mrb[0].mxu0
    %v1161 = vadd.f32 0.0, %v1160
    %1162 = vdwg.mxu0
    %1163 = vmatprep.subr.mxu0 %v216
    %1164 = vmatpush1.msra.mxu0 %v215
    %1165 = vmatprep.subr.mxu0 %v222
    %1166 = vmatpush1.msra.mxu0 %v221
    %1167 = vmatprep.subr.mxu0 %v228
    %1168 = vmatpush1.msra.mxu0 %v227
    %1169 = vmatprep.subr.mxu0 %v234
    %1170 = vmatpush1.msra.mxu0 %v233
    %1171 = vmatprep.subr.mxu0 0.0
    %1172 = vmatpush1.msra.mxu0 0.0
    %1173 = vmatprep.subr.mxu0 0.0
    %1174 = vmatpush1.msra.mxu0 0.0
    %1175 = vmatprep.subr.mxu0 0.0
    %1176 = vmatpush1.msra.mxu0 0.0
    %1177 = vmatprep.subr.mxu0 0.0
    %1178 = vmatpush1.msra.mxu0 0.0
    %1179 = vmatprep.subr.mxu0 0.0
    %1180 = vmatpush1.msra.mxu0 0.0
    %1181 = vmatprep.subr.mxu0 0.0
    %1182 = vmatpush1.msra.mxu0 0.0
    %1183 = vmatprep.subr.mxu0 0.0
    %1184 = vmatpush1.msra.mxu0 0.0
    %1185 = vmatprep.subr.mxu0 0.0
    %1186 = vmatpush1.msra.mxu0 0.0
    %1187 = vmatprep.subr.mxu0 0.0
    %1188 = vmatpush1.msra.mxu0 0.0
    %1189 = vmatprep.subr.mxu0 0.0
    %1190 = vmatpush1.msra.mxu0 0.0
    %1191 = vmatprep.subr.mxu0 0.0
    %1192 = vmatpush1.msra.mxu0 0.0
    %1193 = vmatprep.subr.mxu0 0.0
    %1194 = vmatpush1.msra.mxu0 0.0
    %1195 = vmatprep.subr.mxu0 0.0
    %1196 = vmatpush1.msra.mxu0 0.0
    %1197 = vmatprep.subr.mxu0 0.0
    %1198 = vmatpush1.msra.mxu0 0.0
    %1199 = vmatprep.subr.mxu0 0.0
    %1200 = vmatpush1.msra.mxu0 0.0
    %1201 = vmatprep.subr.mxu0 0.0
    %1202 = vmatpush1.msra.mxu0 0.0
    %1203 = vmatprep.subr.mxu0 0.0
    %1204 = vmatpush1.msra.mxu0 0.0
    %1205 = vmatprep.subr.mxu0 0.0
    %1206 = vmatpush1.msra.mxu0 0.0
    %1207 = vmatprep.subr.mxu0 0.0
    %1208 = vmatpush1.msra.mxu0 0.0
    %1209 = vmatprep.subr.mxu0 0.0
    %1210 = vmatpush1.msra.mxu0 0.0
    %1211 = vmatprep.subr.mxu0 0.0
    %1212 = vmatpush1.msra.mxu0 0.0
    %1213 = vmatprep.subr.mxu0 0.0
    %1214 = vmatpush1.msra.mxu0 0.0
    %1215 = vmatprep.subr.mxu0 0.0
    %1216 = vmatpush1.msra.mxu0 0.0
    %1217 = vmatprep.subr.mxu0 0.0
    %1218 = vmatpush1.msra.mxu0 0.0
    %1219 = vmatprep.subr.mxu0 0.0
    %1220 = vmatpush1.msra.mxu0 0.0
    %1221 = vmatprep.subr.mxu0 0.0
    %1222 = vmatpush1.msra.mxu0 0.0
    %1223 = vmatprep.subr.mxu0 0.0
    %1224 = vmatpush1.msra.mxu0 0.0
    %1225 = vmatprep.subr.mxu0 0.0
    %1226 = vmatpush1.msra.mxu0 0.0
    %1227 = vmatprep.mubr.f32.mxu0 0.0
    %1228 = vmatmul.mubr.f32.gmra.mrb[0].mxu0 %v1081
    %v1229 = vpop.f32.mrb[0].mxu0
    %v1230 = vadd.f32 0.0, %v1229
    %v1231 = vpop.f32.mrb[0].mxu0
    %v1232 = vadd.f32 0.0, %v1231
    %1233 = vmatprep.mubr.f32.mxu0 0.0
    %1234 = vmatmul.mubr.f32.gmra.mrb[0].mxu0 %v1084
    %v1235 = vpop.f32.mrb[0].mxu0
    %v1236 = vadd.f32 0.0, %v1235
    %v1237 = vpop.f32.mrb[0].mxu0
    %v1238 = vadd.f32 0.0, %v1237
    %1239 = vdwg.mxu0
    %1240 = vmatprep.subr.mxu0 %v218
    %1241 = vmatpush1.msra.mxu0 %v217
    %1242 = vmatprep.subr.mxu0 %v224
    %1243 = vmatpush1.msra.mxu0 %v223
    %1244 = vmatprep.subr.mxu0 %v230
    %1245 = vmatpush1.msra.mxu0 %v229
    %1246 = vmatprep.subr.mxu0 %v236
    %1247 = vmatpush1.msra.mxu0 %v235
    %1248 = vmatprep.subr.mxu0 0.0
    %1249 = vmatpush1.msra.mxu0 0.0
    %1250 = vmatprep.subr.mxu0 0.0
    %1251 = vmatpush1.msra.mxu0 0.0
    %1252 = vmatprep.subr.mxu0 0.0
    %1253 = vmatpush1.msra.mxu0 0.0
    %1254 = vmatprep.subr.mxu0 0.0
    %1255 = vmatpush1.msra.mxu0 0.0
    %1256 = vmatprep.subr.mxu0 0.0
    %1257 = vmatpush1.msra.mxu0 0.0
    %1258 = vmatprep.subr.mxu0 0.0
    %1259 = vmatpush1.msra.mxu0 0.0
    %1260 = vmatprep.subr.mxu0 0.0
    %1261 = vmatpush1.msra.mxu0 0.0
    %1262 = vmatprep.subr.mxu0 0.0
    %1263 = vmatpush1.msra.mxu0 0.0
    %1264 = vmatprep.subr.mxu0 0.0
    %1265 = vmatpush1.msra.mxu0 0.0
    %1266 = vmatprep.subr.mxu0 0.0
    %1267 = vmatpush1.msra.mxu0 0.0
    %1268 = vmatprep.subr.mxu0 0.0
    %1269 = vmatpush1.msra.mxu0 0.0
    %1270 = vmatprep.subr.mxu0 0.0
    %1271 = vmatpush1.msra.mxu0 0.0
    %1272 = vmatprep.subr.mxu0 0.0
    %1273 = vmatpush1.msra.mxu0 0.0
    %1274 = vmatprep.subr.mxu0 0.0
    %1275 = vmatpush1.msra.mxu0 0.0
    %1276 = vmatprep.subr.mxu0 0.0
    %1277 = vmatpush1.msra.mxu0 0.0
    %1278 = vmatprep.subr.mxu0 0.0
    %1279 = vmatpush1.msra.mxu0 0.0
    %1280 = vmatprep.subr.mxu0 0.0
    %1281 = vmatpush1.msra.mxu0 0.0
    %1282 = vmatprep.subr.mxu0 0.0
    %1283 = vmatpush1.msra.mxu0 0.0
    %1284 = vmatprep.subr.mxu0 0.0
    %1285 = vmatpush1.msra.mxu0 0.0
    %1286 = vmatprep.subr.mxu0 0.0
    %1287 = vmatpush1.msra.mxu0 0.0
    %1288 = vmatprep.subr.mxu0 0.0
    %1289 = vmatpush1.msra.mxu0 0.0
    %1290 = vmatprep.subr.mxu0 0.0
    %1291 = vmatpush1.msra.mxu0 0.0
    %1292 = vmatprep.subr.mxu0 0.0
    %1293 = vmatpush1.msra.mxu0 0.0
    %1294 = vmatprep.subr.mxu0 0.0
    %1295 = vmatpush1.msra.mxu0 0.0
    %1296 = vmatprep.subr.mxu0 0.0
    %1297 = vmatpush1.msra.mxu0 0.0
    %1298 = vmatprep.subr.mxu0 0.0
    %1299 = vmatpush1.msra.mxu0 0.0
    %1300 = vmatprep.subr.mxu0 0.0
    %1301 = vmatpush1.msra.mxu0 0.0
    %1302 = vmatprep.subr.mxu0 0.0
    %1303 = vmatpush1.msra.mxu0 0.0
    %1304 = vmatprep.mubr.f32.mxu0 0.0
    %1305 = vmatmul.mubr.f32.gmra.mrb[0].mxu0 %v1081
    %v1306 = vpop.f32.mrb[0].mxu0
    %v1307 = vadd.f32 0.0, %v1306
    %v1308 = vpop.f32.mrb[0].mxu0
    %v1309 = vadd.f32 0.0, %v1308
    %1310 = vmatprep.mubr.f32.mxu0 0.0
    %1311 = vmatmul.mubr.f32.gmra.mrb[0].mxu0 %v1084
    %v1312 = vpop.f32.mrb[0].mxu0
    %v1313 = vadd.f32 0.0, %v1312
    %v1314 = vpop.f32.mrb[0].mxu0
    %v1315 = vadd.f32 0.0, %v1314
    %1316 = vdwg.mxu0
    %v1317 = vsel %vm985, %v1153, -1e+30
    %v1318 = vsel %vm985, %v1159, -1e+30
    %1319 = vmax.xlane.f32.xlu0 %v1317
    %v1320 = vpop.xlane.xlu0 %1319
    %1321 = vmax.xlane.f32.xlu0 %v1318
    %v1322 = vpop.xlane.xlu0 %1321
    %v1323 = vsub.f32 %v1317, %v1320
    %v1324 = vsub.f32 %v1318, %v1322
    %v1325 = vmul.f32 %v1323, 1.442695
    %v1326 = vpow.pop %v1325
    %v1327 = vmul.f32 %v1324, 1.442695
    %v1328 = vpow.pop %v1327
    %1329 = vadd.xlane.f32.xlu0 %v1326
    %v1330 = vpop.xlane.xlu0 %1329
    %1331 = vadd.xlane.f32.xlu0 %v1328
    %v1332 = vpop.xlane.xlu0 %1331
    %v1333 = vrcp.pop %v1330
    %v1334 = vrcp.pop %v1332
    %v1335 = vmul.f32 %v1326, %v1333
    %v1336 = vmul.f32 %v1328, %v1334
    %1337 = vmax.xlane.f32.xlu0 %v1335
    %v1338 = vpop.xlane.xlu0 %1337
    %1339 = vmax.xlane.f32.xlu0 %v1336
    %v1340 = vpop.xlane.xlu0 %1339
    %vm1341 = vcmp.ge.f32.partialorder %v1335, %v1338
    %vm1342 = vcmp.ge.f32.partialorder %v1336, %v1340
    %v1343 = vsel %vm1341, %v984, 128
    %v1344 = vsel %vm1342, %v984, 128
    %v1345 = vand.u32 %v1343, 65535
    %v1346 = vshra.s32 %v1343, 16
    %v1347 = vcvt.s32.f32 %v1345
    %v1348 = vcvt.s32.f32 %v1346
    %1349 = vmin.xlane.f32.xlu0 %v1348
    %v1350 = vpop.xlane.xlu0 %1349
    %vm1351 = vcmp.eq.f32.partialorder %v1348, %v1350
    %v1352 = vsel %vm1351, %v1347, inf
    %1353 = vmin.xlane.f32.xlu0 %v1352
    %v1354 = vpop.xlane.xlu0 %1353
    %v1355 = vcvt.f32.s32 %v1354
    %v1356 = vcvt.f32.s32 %v1350
    %v1357 = vshll.u32 %v1356, 16
    %v1358 = vadd.s32 %v1357, %v1355
    %v1359 = vand.u32 %v1344, 65535
    %v1360 = vshra.s32 %v1344, 16
    %v1361 = vcvt.s32.f32 %v1359
    %v1362 = vcvt.s32.f32 %v1360
    %1363 = vmin.xlane.f32.xlu0 %v1362
    %v1364 = vpop.xlane.xlu0 %1363
    %vm1365 = vcmp.eq.f32.partialorder %v1362, %v1364
    %v1366 = vsel %vm1365, %v1361, inf
    %1367 = vmin.xlane.f32.xlu0 %v1366
    %v1368 = vpop.xlane.xlu0 %1367
    %v1369 = vcvt.f32.s32 %v1368
    %v1370 = vcvt.f32.s32 %v1364
    %v1371 = vshll.u32 %v1370, 16
    %v1372 = vadd.s32 %v1371, %v1369
    %vm1373 = vcmp.eq.s32.totalorder %v984, %v1358
    %vm1374 = vcmp.eq.s32.totalorder %v984, %v1372
    %v1375 = vsel %vm1373, 1, 0
    %v1376 = vsel %vm1374, 1, 0
    %v1377 = vcvt.s32.f32 %v1375
    %v1378 = vcvt.s32.f32 %v1376
    %v1379 = vmul.f32 %v1155, %v1377
    %v1380 = vmul.f32 %v1161, %v1378
    %1381 = vadd.xlane.f32.xlu0 %v1379
    %v1382 = vpop.xlane.xlu0 %1381
    %1383 = vadd.xlane.f32.xlu0 %v1380
    %v1384 = vpop.xlane.xlu0 %1383
    %v1385 = vmul.f32 %v1230, %v1377
    %v1386 = vmul.f32 %v1236, %v1378
    %1387 = vadd.xlane.f32.xlu0 %v1385
    %v1388 = vpop.xlane.xlu0 %1387
    %1389 = vadd.xlane.f32.xlu0 %v1386
    %v1390 = vpop.xlane.xlu0 %1389
    %v1391 = vsub.f32 0.0, %v1232
    %v1392 = vsub.f32 0.0, %v1238
    %v1393 = vmul.f32 %v1391, 1.442695
    %v1394 = vpow.pop %v1393
    %v1395 = vmul.f32 %v1392, 1.442695
    %v1396 = vpow.pop %v1395
    %v1397 = vsub.f32 0.0, %v1307
    %v1398 = vsub.f32 0.0, %v1313
    %v1399 = vmul.f32 %v1397, 1.442695
    %v1400 = vpow.pop %v1399
    %v1401 = vmul.f32 %v1398, 1.442695
    %v1402 = vpow.pop %v1401
    %v1403 = vtanh.pop %v1309
    %v1404 = vtanh.pop %v1315
    %v1405 = vmax.f32 %v1403, -0.95
    %v1406 = vmax.f32 %v1404, -0.95
    %v1407 = vmin.f32 %v1405, 0.95
    %v1408 = vmin.f32 %v1406, 0.95
    %v1409 = vsub.f32 %v1382, %v1155
    %v1410 = vsub.f32 %v1384, %v1161
    %v1411 = vsub.f32 %v1388, %v1230
    %v1412 = vsub.f32 %v1390, %v1236
    %v1413 = vmul.f32 %v1409, %v1394
    %v1414 = vmul.f32 %v1410, %v1396
    %v1415 = vmul.f32 %v1413, %v1413
    %v1416 = vmul.f32 %v1414, %v1414
    %v1417 = vmul.f32 %v1411, %v1400
    %v1418 = vmul.f32 %v1412, %v1402
    %v1419 = vmul.f32 %v1417, %v1417
    %v1420 = vmul.f32 %v1418, %v1418
    %v1421 = vadd.f32 %v1415, %v1419
    %v1422 = vadd.f32 %v1416, %v1420
    %v1423 = vmul.f32 %v1407, 2.0
    %v1424 = vmul.f32 %v1408, 2.0
    %v1425 = vmul.f32 %v1409, %v1411
    %v1426 = vmul.f32 %v1410, %v1412
    %v1427 = vmul.f32 %v1425, %v1394
    %v1428 = vmul.f32 %v1426, %v1396
    %v1429 = vmul.f32 %v1427, %v1400
    %v1430 = vmul.f32 %v1428, %v1402
    %v1431 = vmul.f32 %v1423, %v1429
    %v1432 = vmul.f32 %v1424, %v1430
    %v1433 = vsub.f32 %v1421, %v1431
    %v1434 = vsub.f32 %v1422, %v1432
    %v1435 = vmul.f32 %v1407, %v1407
    %v1436 = vmul.f32 %v1408, %v1408
    %v1437 = vsub.f32 1.0, %v1435
    %v1438 = vsub.f32 1.0, %v1436
    %v1439 = vmul.f32 %v1433, -0.5
    %v1440 = vmul.f32 %v1434, -0.5
    %v1441 = vrcp.pop %v1437
    %v1442 = vmul.f32 %v1439, %v1441
    %v1443 = vrcp.pop %v1438
    %v1444 = vmul.f32 %v1440, %v1443
    %v1445 = vadd.f32 %v1232, %v1307
    %v1446 = vadd.f32 %v1238, %v1313
    %v1447 = vmul.f32 %v1445, 1.442695
    %v1448 = vpow.pop %v1447
    %v1449 = vmul.f32 %v1446, 1.442695
    %v1450 = vpow.pop %v1449
    %v1451 = vmul.f32 %v1448, 6.2831855
    %v1452 = vmul.f32 %v1450, 6.2831855
    %v1453 = vrsqrt.pop %v1437
    %v1454 = vmul.f32 %v1437, %v1453
    %vm1455 = vcmp.eq.f32.partialorder %v1437, inf
    %v1456 = vsel %vm1455, %v1437, %v1454
    %vm1457 = vcmp.eq.f32.partialorder %v1437, 0.0
    %v1458 = vand.u32 %v1437, 2147483648
    %v1459 = vsel %vm1457, %v1458, %v1456
    %v1460 = vrsqrt.pop %v1438
    %v1461 = vmul.f32 %v1438, %v1460
    %vm1462 = vcmp.eq.f32.partialorder %v1438, inf
    %v1463 = vsel %vm1462, %v1438, %v1461
    %vm1464 = vcmp.eq.f32.partialorder %v1438, 0.0
    %v1465 = vand.u32 %v1438, 2147483648
    %v1466 = vsel %vm1464, %v1465, %v1463
    %v1467 = vmul.f32 %v1451, %v1459
    %v1468 = vmul.f32 %v1452, %v1466
    %v1469 = vmax.f32 %v1467, 1e-05
    %v1470 = vmax.f32 %v1468, 1e-05
    %v1471 = vmul.f32 %v1442, 1.442695
    %v1472 = vpow.pop %v1471
    %v1473 = vmul.f32 %v1444, 1.442695
    %v1474 = vpow.pop %v1473
    %v1475 = vmul.f32 %v1335, %v1472
    %v1476 = vmul.f32 %v1336, %v1474
    %v1477 = vrcp.pop %v1469
    %v1478 = vmul.f32 %v1475, %v1477
    %v1479 = vrcp.pop %v1470
    %v1480 = vmul.f32 %v1476, %v1479
    %v1481 = vsel %vm985, %v1478, 0.0
    %v1482 = vsel %vm985, %v1480, 0.0
    %1483 = vadd.xlane.f32.xlu0 %v1481
    %v1484 = vpop.xlane.xlu0 %1483
    %1485 = vadd.xlane.f32.xlu0 %v1482
    %v1486 = vpop.xlane.xlu0 %1485
    %v1487 = vlaneseq
    %v1488 = vshrl.u32 %v1487, 7
    %v1489 = vsub.s32 0, %v1488
    %v1490 = vrot.slane %v265, %v1489
    %v1491 = vmul.f32 %v1382, %v1490
    %v1492 = vmul.f32 %v1384, %v1490
    %v1493 = vlaneseq
    %v1494 = vshrl.u32 %v1493, 7
    %v1495 = vsub.s32 0, %v1494
    %v1496 = vrot.slane %v266, %v1495
    %v1497 = vmul.f32 %v1388, %v1496
    %v1498 = vmul.f32 %v1390, %v1496
    %v1499 = vadd.f32 %v1491, %v1497
    %v1500 = vadd.f32 %v1492, %v1498
    %v1501 = vlaneseq
    %v1502 = vshrl.u32 %v1501, 7
    %v1503 = vsub.s32 0, %v1502
    %v1504 = vrot.slane %v264, %v1503
    %v1505 = vadd.f32 %v1499, %v1504
    %v1506 = vadd.f32 %v1500, %v1504
    %v1507 = vpack.c.bf16 %v1506, %v1505
    %v1524 = vunpack.c.l.b16 %v185
    %v1525 = vunpack.c.l.b16 %v186
    %v1526 = vunpack.c.l.b16 %v187
    %v1527 = vunpack.c.l.b16 %v188
    %v1528 = vunpack.c.l.b16 %v189
    %v1529 = vunpack.c.l.b16 %v190
    %v1530 = vunpack.c.l.b16 %v191
    %v1531 = vunpack.c.l.b16 %v192
    %v1532 = vunpack.c.l.b16 %v193
    %v1533 = vunpack.c.l.b16 %v194
    %v1534 = vunpack.c.l.b16 %v195
    %v1535 = vunpack.c.l.b16 %v196
    %v1536 = vunpack.c.l.b16 %v197
    %v1537 = vunpack.c.l.b16 %v198
    %v1538 = vunpack.c.l.b16 %v199
    %v1539 = vunpack.c.l.b16 %v200
    %v1540 = vpack.c.b16 %v1525, %v1524
    %v1541 = vpack.c.b16 %v1527, %v1526
    %v1542 = vpack.c.b16 %v1529, %v1528
    %v1543 = vpack.c.b16 %v1531, %v1530
    %v1544 = vpack.c.b16 %v1533, %v1532
    %v1545 = vpack.c.b16 %v1535, %v1534
    %v1546 = vpack.c.b16 %v1537, %v1536
    %v1547 = vpack.c.b16 %v1539, %v1538
    %1556 = vmatprep.subr.bf16.mxu0 0
    %1557 = vmatpush1.bf16.msra.mxu0 %v1540
    %1558 = vmatprep.subr.bf16.mxu0 0
    %1559 = vmatpush1.bf16.msra.mxu0 %v1541
    %1560 = vmatprep.subr.bf16.mxu0 0
    %1561 = vmatpush1.bf16.msra.mxu0 %v1542
    %1562 = vmatprep.subr.bf16.mxu0 0
    %1563 = vmatpush1.bf16.msra.mxu0 %v1543
    %1564 = vmatprep.subr.bf16.mxu0 0
    %1565 = vmatpush1.bf16.msra.mxu0 %v1544
    %1566 = vmatprep.subr.bf16.mxu0 0
    %1567 = vmatpush1.bf16.msra.mxu0 %v1545
    %1568 = vmatprep.subr.bf16.mxu0 0
    %1569 = vmatpush1.bf16.msra.mxu0 %v1546
    %1570 = vmatprep.subr.bf16.mxu0 0
    %1571 = vmatpush1.bf16.msra.mxu0 %v1547
    %1572 = vmatprep.subr.bf16.mxu0 0
    %1573 = vmatpush1.bf16.msra.mxu0 0
    %1574 = vmatprep.subr.bf16.mxu0 0
    %1575 = vmatpush1.bf16.msra.mxu0 0
    %1576 = vmatprep.subr.bf16.mxu0 0
    %1577 = vmatpush1.bf16.msra.mxu0 0
    %1578 = vmatprep.subr.bf16.mxu0 0
    %1579 = vmatpush1.bf16.msra.mxu0 0
    %1580 = vmatprep.subr.bf16.mxu0 0
    %1581 = vmatpush1.bf16.msra.mxu0 0
    %1582 = vmatprep.subr.bf16.mxu0 0
    %1583 = vmatpush1.bf16.msra.mxu0 0
    %1584 = vmatprep.subr.bf16.mxu0 0
    %1585 = vmatpush1.bf16.msra.mxu0 0
    %1586 = vmatprep.subr.bf16.mxu0 0
    %1587 = vmatpush1.bf16.msra.mxu0 0
    %1588 = vmatprep.mubr.bf16.mxu0 0
    %1589 = vmatmul.mubr.bf16.gmra.mrb[0].mxu0 %v1507
    %v1590 = vpop.f32.mrb[0].mxu0
    %v1591 = vadd.f32 0.0, %v1590
    %v1592 = vpop.f32.mrb[0].mxu0
    %v1593 = vpop.f32.mrb[0].mxu0
    %v1594 = vadd.f32 0.0, %v1593
    %v1595 = vpop.f32.mrb[0].mxu0
    %1596 = vdwg.mxu0
    %v1613 = vunpack.c.l.b16 %v169
    %v1614 = vunpack.c.l.b16 %v170
    %v1615 = vunpack.c.l.b16 %v171
    %v1616 = vunpack.c.l.b16 %v172
    %v1617 = vunpack.c.l.b16 %v173
    %v1618 = vunpack.c.l.b16 %v174
    %v1619 = vunpack.c.l.b16 %v175
    %v1620 = vunpack.c.l.b16 %v176
    %v1621 = vunpack.c.l.b16 %v177
    %v1622 = vunpack.c.l.b16 %v178
    %v1623 = vunpack.c.l.b16 %v179
    %v1624 = vunpack.c.l.b16 %v180
    %v1625 = vunpack.c.l.b16 %v181
    %v1626 = vunpack.c.l.b16 %v182
    %v1627 = vunpack.c.l.b16 %v183
    %v1628 = vunpack.c.l.b16 %v184
    %v1629 = vpack.c.b16 %v1614, %v1613
    %v1630 = vpack.c.b16 %v1616, %v1615
    %v1631 = vpack.c.b16 %v1618, %v1617
    %v1632 = vpack.c.b16 %v1620, %v1619
    %v1633 = vpack.c.b16 %v1622, %v1621
    %v1634 = vpack.c.b16 %v1624, %v1623
    %v1635 = vpack.c.b16 %v1626, %v1625
    %v1636 = vpack.c.b16 %v1628, %v1627
    %1645 = vmatprep.subr.bf16.mxu0 0
    %1646 = vmatpush1.bf16.msra.mxu0 %v1629
    %1647 = vmatprep.subr.bf16.mxu0 0
    %1648 = vmatpush1.bf16.msra.mxu0 %v1630
    %1649 = vmatprep.subr.bf16.mxu0 0
    %1650 = vmatpush1.bf16.msra.mxu0 %v1631
    %1651 = vmatprep.subr.bf16.mxu0 0
    %1652 = vmatpush1.bf16.msra.mxu0 %v1632
    %1653 = vmatprep.subr.bf16.mxu0 0
    %1654 = vmatpush1.bf16.msra.mxu0 %v1633
    %1655 = vmatprep.subr.bf16.mxu0 0
    %1656 = vmatpush1.bf16.msra.mxu0 %v1634
    %1657 = vmatprep.subr.bf16.mxu0 0
    %1658 = vmatpush1.bf16.msra.mxu0 %v1635
    %1659 = vmatprep.subr.bf16.mxu0 0
    %1660 = vmatpush1.bf16.msra.mxu0 %v1636
    %1661 = vmatprep.subr.bf16.mxu0 0
    %1662 = vmatpush1.bf16.msra.mxu0 0
    %1663 = vmatprep.subr.bf16.mxu0 0
    %1664 = vmatpush1.bf16.msra.mxu0 0
    %1665 = vmatprep.subr.bf16.mxu0 0
    %1666 = vmatpush1.bf16.msra.mxu0 0
    %1667 = vmatprep.subr.bf16.mxu0 0
    %1668 = vmatpush1.bf16.msra.mxu0 0
    %1669 = vmatprep.subr.bf16.mxu0 0
    %1670 = vmatpush1.bf16.msra.mxu0 0
    %1671 = vmatprep.subr.bf16.mxu0 0
    %1672 = vmatpush1.bf16.msra.mxu0 0
    %1673 = vmatprep.subr.bf16.mxu0 0
    %1674 = vmatpush1.bf16.msra.mxu0 0
    %1675 = vmatprep.subr.bf16.mxu0 0
    %1676 = vmatpush1.bf16.msra.mxu0 0
    %1677 = vmatprep.mubr.bf16.mxu0 0
    %1678 = vmatmul.mubr.bf16.gmra.mrb[0].mxu0 %v982
    %v1679 = vpop.f32.mrb[0].mxu0
    %v1680 = vadd.f32 %v1591, %v1679
    %v1681 = vpop.f32.mrb[0].mxu0
    %v1682 = vpop.f32.mrb[0].mxu0
    %v1683 = vadd.f32 %v1594, %v1682
    %v1684 = vpop.f32.mrb[0].mxu0
    %1685 = vdwg.mxu0
    %v1686 = vlaneseq
    %v1687 = vshrl.u32 %v1686, 7
    %v1688 = vsub.s32 0, %v1687
    %v1689 = vrot.slane %v268, %v1688
    %v1690 = vadd.f32 %v1680, %v1689
    %v1691 = vadd.f32 %v1683, %v1689
    %v1693 = vsel %vm1079, %v1690, 0
    %v1696 = vsel %vm1079, %v1691, 0
    %1698 = vmatprep.subr.mxu0 %v246
    %1699 = vmatpush1.msra.mxu0 %v245
    %1700 = vmatprep.subr.mxu0 %v250
    %1701 = vmatpush1.msra.mxu0 %v249
    %1702 = vmatprep.subr.mxu0 %v254
    %1703 = vmatpush1.msra.mxu0 %v253
    %1704 = vmatprep.subr.mxu0 %v258
    %1705 = vmatpush1.msra.mxu0 %v257
    %1706 = vmatprep.subr.mxu0 0.0
    %1707 = vmatpush1.msra.mxu0 0.0
    %1708 = vmatprep.subr.mxu0 0.0
    %1709 = vmatpush1.msra.mxu0 0.0
    %1710 = vmatprep.subr.mxu0 0.0
    %1711 = vmatpush1.msra.mxu0 0.0
    %1712 = vmatprep.subr.mxu0 0.0
    %1713 = vmatpush1.msra.mxu0 0.0
    %1714 = vmatprep.subr.mxu0 0.0
    %1715 = vmatpush1.msra.mxu0 0.0
    %1716 = vmatprep.subr.mxu0 0.0
    %1717 = vmatpush1.msra.mxu0 0.0
    %1718 = vmatprep.subr.mxu0 0.0
    %1719 = vmatpush1.msra.mxu0 0.0
    %1720 = vmatprep.subr.mxu0 0.0
    %1721 = vmatpush1.msra.mxu0 0.0
    %1722 = vmatprep.subr.mxu0 0.0
    %1723 = vmatpush1.msra.mxu0 0.0
    %1724 = vmatprep.subr.mxu0 0.0
    %1725 = vmatpush1.msra.mxu0 0.0
    %1726 = vmatprep.subr.mxu0 0.0
    %1727 = vmatpush1.msra.mxu0 0.0
    %1728 = vmatprep.subr.mxu0 0.0
    %1729 = vmatpush1.msra.mxu0 0.0
    %1730 = vmatprep.subr.mxu0 0.0
    %1731 = vmatpush1.msra.mxu0 0.0
    %1732 = vmatprep.subr.mxu0 0.0
    %1733 = vmatpush1.msra.mxu0 0.0
    %1734 = vmatprep.subr.mxu0 0.0
    %1735 = vmatpush1.msra.mxu0 0.0
    %1736 = vmatprep.subr.mxu0 0.0
    %1737 = vmatpush1.msra.mxu0 0.0
    %1738 = vmatprep.subr.mxu0 0.0
    %1739 = vmatpush1.msra.mxu0 0.0
    %1740 = vmatprep.subr.mxu0 0.0
    %1741 = vmatpush1.msra.mxu0 0.0
    %1742 = vmatprep.subr.mxu0 0.0
    %1743 = vmatpush1.msra.mxu0 0.0
    %1744 = vmatprep.subr.mxu0 0.0
    %1745 = vmatpush1.msra.mxu0 0.0
    %1746 = vmatprep.subr.mxu0 0.0
    %1747 = vmatpush1.msra.mxu0 0.0
    %1748 = vmatprep.subr.mxu0 0.0
    %1749 = vmatpush1.msra.mxu0 0.0
    %1750 = vmatprep.subr.mxu0 0.0
    %1751 = vmatpush1.msra.mxu0 0.0
    %1752 = vmatprep.subr.mxu0 0.0
    %1753 = vmatpush1.msra.mxu0 0.0
    %1754 = vmatprep.subr.mxu0 0.0
    %1755 = vmatpush1.msra.mxu0 0.0
    %1756 = vmatprep.subr.mxu0 0.0
    %1757 = vmatpush1.msra.mxu0 0.0
    %1758 = vmatprep.subr.mxu0 0.0
    %1759 = vmatpush1.msra.mxu0 0.0
    %1760 = vmatprep.subr.mxu0 0.0
    %1761 = vmatpush1.msra.mxu0 0.0
    %1762 = vmatprep.mubr.f32.mxu0 0.0
    %1763 = vmatmul.mubr.f32.gmra.mrb[0].mxu0 %v1693
    %v1764 = vpop.f32.mrb[0].mxu0
    %v1765 = vadd.f32 0.0, %v1764
    %v1766 = vpop.f32.mrb[0].mxu0
    %v1767 = vadd.f32 0.0, %v1766
    %1768 = vmatprep.mubr.f32.mxu0 0.0
    %1769 = vmatmul.mubr.f32.gmra.mrb[0].mxu0 %v1696
    %v1770 = vpop.f32.mrb[0].mxu0
    %v1771 = vadd.f32 0.0, %v1770
    %v1772 = vpop.f32.mrb[0].mxu0
    %v1773 = vadd.f32 0.0, %v1772
    %1774 = vdwg.mxu0
    %1775 = vmatprep.subr.mxu0 %v248
    %1776 = vmatpush1.msra.mxu0 %v247
    %1777 = vmatprep.subr.mxu0 %v252
    %1778 = vmatpush1.msra.mxu0 %v251
    %1779 = vmatprep.subr.mxu0 %v256
    %1780 = vmatpush1.msra.mxu0 %v255
    %1781 = vmatprep.subr.mxu0 %v260
    %1782 = vmatpush1.msra.mxu0 %v259
    %1783 = vmatprep.subr.mxu0 0.0
    %1784 = vmatpush1.msra.mxu0 0.0
    %1785 = vmatprep.subr.mxu0 0.0
    %1786 = vmatpush1.msra.mxu0 0.0
    %1787 = vmatprep.subr.mxu0 0.0
    %1788 = vmatpush1.msra.mxu0 0.0
    %1789 = vmatprep.subr.mxu0 0.0
    %1790 = vmatpush1.msra.mxu0 0.0
    %1791 = vmatprep.subr.mxu0 0.0
    %1792 = vmatpush1.msra.mxu0 0.0
    %1793 = vmatprep.subr.mxu0 0.0
    %1794 = vmatpush1.msra.mxu0 0.0
    %1795 = vmatprep.subr.mxu0 0.0
    %1796 = vmatpush1.msra.mxu0 0.0
    %1797 = vmatprep.subr.mxu0 0.0
    %1798 = vmatpush1.msra.mxu0 0.0
    %1799 = vmatprep.subr.mxu0 0.0
    %1800 = vmatpush1.msra.mxu0 0.0
    %1801 = vmatprep.subr.mxu0 0.0
    %1802 = vmatpush1.msra.mxu0 0.0
    %1803 = vmatprep.subr.mxu0 0.0
    %1804 = vmatpush1.msra.mxu0 0.0
    %1805 = vmatprep.subr.mxu0 0.0
    %1806 = vmatpush1.msra.mxu0 0.0
    %1807 = vmatprep.subr.mxu0 0.0
    %1808 = vmatpush1.msra.mxu0 0.0
    %1809 = vmatprep.subr.mxu0 0.0
    %1810 = vmatpush1.msra.mxu0 0.0
    %1811 = vmatprep.subr.mxu0 0.0
    %1812 = vmatpush1.msra.mxu0 0.0
    %1813 = vmatprep.subr.mxu0 0.0
    %1814 = vmatpush1.msra.mxu0 0.0
    %1815 = vmatprep.subr.mxu0 0.0
    %1816 = vmatpush1.msra.mxu0 0.0
    %1817 = vmatprep.subr.mxu0 0.0
    %1818 = vmatpush1.msra.mxu0 0.0
    %1819 = vmatprep.subr.mxu0 0.0
    %1820 = vmatpush1.msra.mxu0 0.0
    %1821 = vmatprep.subr.mxu0 0.0
    %1822 = vmatpush1.msra.mxu0 0.0
    %1823 = vmatprep.subr.mxu0 0.0
    %1824 = vmatpush1.msra.mxu0 0.0
    %1825 = vmatprep.subr.mxu0 0.0
    %1826 = vmatpush1.msra.mxu0 0.0
    %1827 = vmatprep.subr.mxu0 0.0
    %1828 = vmatpush1.msra.mxu0 0.0
    %1829 = vmatprep.subr.mxu0 0.0
    %1830 = vmatpush1.msra.mxu0 0.0
    %1831 = vmatprep.subr.mxu0 0.0
    %1832 = vmatpush1.msra.mxu0 0.0
    %1833 = vmatprep.subr.mxu0 0.0
    %1834 = vmatpush1.msra.mxu0 0.0
    %1835 = vmatprep.subr.mxu0 0.0
    %1836 = vmatpush1.msra.mxu0 0.0
    %1837 = vmatprep.subr.mxu0 0.0
    %1838 = vmatpush1.msra.mxu0 0.0
    %1839 = vmatprep.mubr.f32.mxu0 0.0
    %1840 = vmatmul.mubr.f32.gmra.mrb[0].mxu0 %v1693
    %v1841 = vpop.f32.mrb[0].mxu0
    %v1842 = vadd.f32 0.0, %v1841
    %v1843 = vpop.f32.mrb[0].mxu0
    %1844 = vmatprep.mubr.f32.mxu0 0.0
    %1845 = vmatmul.mubr.f32.gmra.mrb[0].mxu0 %v1696
    %v1846 = vpop.f32.mrb[0].mxu0
    %v1847 = vadd.f32 0.0, %v1846
    %v1848 = vpop.f32.mrb[0].mxu0
    %1849 = vdwg.mxu0
    %v1850 = vsel %vm985, %v1765, -1e+30
    %v1851 = vsel %vm985, %v1771, -1e+30
    %1852 = vmax.xlane.f32.xlu0 %v1850
    %v1853 = vpop.xlane.xlu0 %1852
    %1854 = vmax.xlane.f32.xlu0 %v1851
    %v1855 = vpop.xlane.xlu0 %1854
    %v1856 = vsub.f32 %v1850, %v1853
    %v1857 = vsub.f32 %v1851, %v1855
    %v1858 = vmul.f32 %v1856, 1.442695
    %v1859 = vpow.pop %v1858
    %v1860 = vmul.f32 %v1857, 1.442695
    %v1861 = vpow.pop %v1860
    %1862 = vadd.xlane.f32.xlu0 %v1859
    %v1863 = vpop.xlane.xlu0 %1862
    %1864 = vadd.xlane.f32.xlu0 %v1861
    %v1865 = vpop.xlane.xlu0 %1864
    %v1866 = vrcp.pop %v1863
    %v1867 = vrcp.pop %v1865
    %v1868 = vmul.f32 %v1859, %v1866
    %v1869 = vmul.f32 %v1861, %v1867
    %1870 = vmax.xlane.f32.xlu0 %v1868
    %v1871 = vpop.xlane.xlu0 %1870
    %1872 = vmax.xlane.f32.xlu0 %v1869
    %v1873 = vpop.xlane.xlu0 %1872
    %vm1874 = vcmp.ge.f32.partialorder %v1868, %v1871
    %vm1875 = vcmp.ge.f32.partialorder %v1869, %v1873
    %v1876 = vsel %vm1874, %v984, 128
    %v1877 = vsel %vm1875, %v984, 128
    %v1878 = vand.u32 %v1876, 65535
    %v1879 = vshra.s32 %v1876, 16
    %v1880 = vcvt.s32.f32 %v1878
    %v1881 = vcvt.s32.f32 %v1879
    %1882 = vmin.xlane.f32.xlu0 %v1881
    %v1883 = vpop.xlane.xlu0 %1882
    %vm1884 = vcmp.eq.f32.partialorder %v1881, %v1883
    %v1885 = vsel %vm1884, %v1880, inf
    %1886 = vmin.xlane.f32.xlu0 %v1885
    %v1887 = vpop.xlane.xlu0 %1886
    %v1888 = vcvt.f32.s32 %v1887
    %v1889 = vcvt.f32.s32 %v1883
    %v1890 = vshll.u32 %v1889, 16
    %v1891 = vadd.s32 %v1890, %v1888
    %v1892 = vand.u32 %v1877, 65535
    %v1893 = vshra.s32 %v1877, 16
    %v1894 = vcvt.s32.f32 %v1892
    %v1895 = vcvt.s32.f32 %v1893
    %1896 = vmin.xlane.f32.xlu0 %v1895
    %v1897 = vpop.xlane.xlu0 %1896
    %vm1898 = vcmp.eq.f32.partialorder %v1895, %v1897
    %v1899 = vsel %vm1898, %v1894, inf
    %1900 = vmin.xlane.f32.xlu0 %v1899
    %v1901 = vpop.xlane.xlu0 %1900
    %v1902 = vcvt.f32.s32 %v1901
    %v1903 = vcvt.f32.s32 %v1897
    %v1904 = vshll.u32 %v1903, 16
    %v1905 = vadd.s32 %v1904, %v1902
    %vm1906 = vcmp.eq.s32.totalorder %v984, %v1891
    %vm1907 = vcmp.eq.s32.totalorder %v984, %v1905
    %v1908 = vsel %vm1906, 1, 0
    %v1909 = vsel %vm1907, 1, 0
    %v1910 = vcvt.s32.f32 %v1908
    %v1911 = vcvt.s32.f32 %v1909
    %v1912 = vmul.f32 %v1767, %v1910
    %v1913 = vmul.f32 %v1773, %v1911
    %1914 = vadd.xlane.f32.xlu0 %v1912
    %v1915 = vpop.xlane.xlu0 %1914
    %1916 = vadd.xlane.f32.xlu0 %v1913
    %v1917 = vpop.xlane.xlu0 %1916
    %v1918 = vmul.f32 %v1842, %v1910
    %v1919 = vmul.f32 %v1847, %v1911
    %1920 = vadd.xlane.f32.xlu0 %v1918
    %v1921 = vpop.xlane.xlu0 %1920
    %1922 = vadd.xlane.f32.xlu0 %v1919
    %v1923 = vpop.xlane.xlu0 %1922
    %1924 = vmatprep.subr.mxu0 0.0
    %1925 = vmatpush1.msra.mxu0 %v149
    %1926 = vmatprep.subr.mxu0 0.0
    %1927 = vmatpush1.msra.mxu0 %v150
    %1928 = vmatprep.subr.mxu0 0.0
    %1929 = vmatpush1.msra.mxu0 %v151
    %1930 = vmatprep.subr.mxu0 0.0
    %1931 = vmatpush1.msra.mxu0 %v152
    %1932 = vmatprep.subr.mxu0 0.0
    %1933 = vmatpush1.msra.mxu0 0.0
    %1934 = vmatprep.subr.mxu0 0.0
    %1935 = vmatpush1.msra.mxu0 0.0
    %1936 = vmatprep.subr.mxu0 0.0
    %1937 = vmatpush1.msra.mxu0 0.0
    %1938 = vmatprep.subr.mxu0 0.0
    %1939 = vmatpush1.msra.mxu0 0.0
    %1940 = vmatprep.subr.mxu0 0.0
    %1941 = vmatpush1.msra.mxu0 0.0
    %1942 = vmatprep.subr.mxu0 0.0
    %1943 = vmatpush1.msra.mxu0 0.0
    %1944 = vmatprep.subr.mxu0 0.0
    %1945 = vmatpush1.msra.mxu0 0.0
    %1946 = vmatprep.subr.mxu0 0.0
    %1947 = vmatpush1.msra.mxu0 0.0
    %1948 = vmatprep.subr.mxu0 0.0
    %1949 = vmatpush1.msra.mxu0 0.0
    %1950 = vmatprep.subr.mxu0 0.0
    %1951 = vmatpush1.msra.mxu0 0.0
    %1952 = vmatprep.subr.mxu0 0.0
    %1953 = vmatpush1.msra.mxu0 0.0
    %1954 = vmatprep.subr.mxu0 0.0
    %1955 = vmatpush1.msra.mxu0 0.0
    %1956 = vmatprep.subr.mxu0 0.0
    %1957 = vmatpush1.msra.mxu0 0.0
    %1958 = vmatprep.subr.mxu0 0.0
    %1959 = vmatpush1.msra.mxu0 0.0
    %1960 = vmatprep.subr.mxu0 0.0
    %1961 = vmatpush1.msra.mxu0 0.0
    %1962 = vmatprep.subr.mxu0 0.0
    %1963 = vmatpush1.msra.mxu0 0.0
    %1964 = vmatprep.subr.mxu0 0.0
    %1965 = vmatpush1.msra.mxu0 0.0
    %1966 = vmatprep.subr.mxu0 0.0
    %1967 = vmatpush1.msra.mxu0 0.0
    %1968 = vmatprep.subr.mxu0 0.0
    %1969 = vmatpush1.msra.mxu0 0.0
    %1970 = vmatprep.subr.mxu0 0.0
    %1971 = vmatpush1.msra.mxu0 0.0
    %1972 = vmatprep.subr.mxu0 0.0
    %1973 = vmatpush1.msra.mxu0 0.0
    %1974 = vmatprep.subr.mxu0 0.0
    %1975 = vmatpush1.msra.mxu0 0.0
    %1976 = vmatprep.subr.mxu0 0.0
    %1977 = vmatpush1.msra.mxu0 0.0
    %1978 = vmatprep.subr.mxu0 0.0
    %1979 = vmatpush1.msra.mxu0 0.0
    %1980 = vmatprep.subr.mxu0 0.0
    %1981 = vmatpush1.msra.mxu0 0.0
    %1982 = vmatprep.subr.mxu0 0.0
    %1983 = vmatpush1.msra.mxu0 0.0
    %1984 = vmatprep.subr.mxu0 0.0
    %1985 = vmatpush1.msra.mxu0 0.0
    %1986 = vmatprep.subr.mxu0 0.0
    %1987 = vmatpush1.msra.mxu0 0.0
    %1988 = vmatprep.mubr.f32.mxu0 0.0
    %1989 = vmatmul.mubr.f32.gmra.mrb[0].mxu0 %v1693
    %v1990 = vpop.f32.mrb[0].mxu0
    %v1991 = vadd.f32 0.0, %v1990
    %v1992 = vpop.f32.mrb[0].mxu0
    %1993 = vmatprep.mubr.f32.mxu0 0.0
    %1994 = vmatmul.mubr.f32.gmra.mrb[0].mxu0 %v1696
    %v1995 = vpop.f32.mrb[0].mxu0
    %v1996 = vadd.f32 0.0, %v1995
    %v1997 = vpop.f32.mrb[0].mxu0
    %1998 = vdwg.mxu0
    %1999 = vmatprep.subr.mxu0 0.0
    %2000 = vmatpush1.msra.mxu0 %v141
    %2001 = vmatprep.subr.mxu0 0.0
    %2002 = vmatpush1.msra.mxu0 %v142
    %2003 = vmatprep.subr.mxu0 0.0
    %2004 = vmatpush1.msra.mxu0 %v143
    %2005 = vmatprep.subr.mxu0 0.0
    %2006 = vmatpush1.msra.mxu0 %v144
    %2007 = vmatprep.subr.mxu0 0.0
    %2008 = vmatpush1.msra.mxu0 0.0
    %2009 = vmatprep.subr.mxu0 0.0
    %2010 = vmatpush1.msra.mxu0 0.0
    %2011 = vmatprep.subr.mxu0 0.0
    %2012 = vmatpush1.msra.mxu0 0.0
    %2013 = vmatprep.subr.mxu0 0.0
    %2014 = vmatpush1.msra.mxu0 0.0
    %2015 = vmatprep.subr.mxu0 0.0
    %2016 = vmatpush1.msra.mxu0 0.0
    %2017 = vmatprep.subr.mxu0 0.0
    %2018 = vmatpush1.msra.mxu0 0.0
    %2019 = vmatprep.subr.mxu0 0.0
    %2020 = vmatpush1.msra.mxu0 0.0
    %2021 = vmatprep.subr.mxu0 0.0
    %2022 = vmatpush1.msra.mxu0 0.0
    %2023 = vmatprep.subr.mxu0 0.0
    %2024 = vmatpush1.msra.mxu0 0.0
    %2025 = vmatprep.subr.mxu0 0.0
    %2026 = vmatpush1.msra.mxu0 0.0
    %2027 = vmatprep.subr.mxu0 0.0
    %2028 = vmatpush1.msra.mxu0 0.0
    %2029 = vmatprep.subr.mxu0 0.0
    %2030 = vmatpush1.msra.mxu0 0.0
    %2031 = vmatprep.subr.mxu0 0.0
    %2032 = vmatpush1.msra.mxu0 0.0
    %2033 = vmatprep.subr.mxu0 0.0
    %2034 = vmatpush1.msra.mxu0 0.0
    %2035 = vmatprep.subr.mxu0 0.0
    %2036 = vmatpush1.msra.mxu0 0.0
    %2037 = vmatprep.subr.mxu0 0.0
    %2038 = vmatpush1.msra.mxu0 0.0
    %2039 = vmatprep.subr.mxu0 0.0
    %2040 = vmatpush1.msra.mxu0 0.0
    %2041 = vmatprep.subr.mxu0 0.0
    %2042 = vmatpush1.msra.mxu0 0.0
    %2043 = vmatprep.subr.mxu0 0.0
    %2044 = vmatpush1.msra.mxu0 0.0
    %2045 = vmatprep.subr.mxu0 0.0
    %2046 = vmatpush1.msra.mxu0 0.0
    %2047 = vmatprep.subr.mxu0 0.0
    %2048 = vmatpush1.msra.mxu0 0.0
    %2049 = vmatprep.subr.mxu0 0.0
    %2050 = vmatpush1.msra.mxu0 0.0
    %2051 = vmatprep.subr.mxu0 0.0
    %2052 = vmatpush1.msra.mxu0 0.0
    %2053 = vmatprep.subr.mxu0 0.0
    %2054 = vmatpush1.msra.mxu0 0.0
    %2055 = vmatprep.subr.mxu0 0.0
    %2056 = vmatpush1.msra.mxu0 0.0
    %2057 = vmatprep.subr.mxu0 0.0
    %2058 = vmatpush1.msra.mxu0 0.0
    %2059 = vmatprep.subr.mxu0 0.0
    %2060 = vmatpush1.msra.mxu0 0.0
    %2061 = vmatprep.subr.mxu0 0.0
    %2062 = vmatpush1.msra.mxu0 0.0
    %2063 = vmatprep.mubr.f32.mxu0 0.0
    %2064 = vmatmul.mubr.f32.gmra.mrb[0].mxu0 %v1081
    %v2065 = vpop.f32.mrb[0].mxu0
    %v2066 = vadd.f32 %v1991, %v2065
    %v2067 = vpop.f32.mrb[0].mxu0
    %2068 = vmatprep.mubr.f32.mxu0 0.0
    %2069 = vmatmul.mubr.f32.gmra.mrb[0].mxu0 %v1084
    %v2070 = vpop.f32.mrb[0].mxu0
    %v2071 = vadd.f32 %v1996, %v2070
    %v2072 = vpop.f32.mrb[0].mxu0
    %2073 = vdwg.mxu0
    %vm2074 = vcmp.eq.s32.totalorder %v984, 60
    %v2075 = vsel %vm2074, %v1382, %v2066
    %v2076 = vsel %vm2074, %v1384, %v2071
    %vm2077 = vcmp.eq.s32.totalorder %v984, 61
    %v2078 = vsel %vm2077, %v1388, %v2075
    %v2079 = vsel %vm2077, %v1390, %v2076
    %vm2080 = vcmp.eq.s32.totalorder %v984, 62
    %v2081 = vsel %vm2080, %v1915, %v2078
    %v2082 = vsel %vm2080, %v1917, %v2079
    %vm2083 = vcmp.eq.s32.totalorder %v984, 63
    %v2084 = vsel %vm2083, %v1921, %v2081
    %v2085 = vsel %vm2083, %v1923, %v2082
    %vm2086 = vcmp.eq.s32.totalorder %v984, 64
    %v2087 = vsel %vm2086, %v1484, %v2084
    %v2088 = vsel %vm2086, %v1486, %v2085
    %2089 = vst [vmem:[%s12] sm:$0xff] %v2087
    %2090 = vst [vmem:[%s12 + $0x8] sm:$0xff] %v2088
    // Predicated region
    $region50: #{pdf_decoder_forward.1} parent=1 // pred_check
      _
    $region51: #{pdf_decoder_forward.1} parent=1 // pred_check_branch
      %2092 = sbr.rel (0) target = $region53
    $region52: #{pdf_decoder_forward.1} parent=1 // pred_region
      %s2094 = ssub.s32 256, 256
      %2095 = vsyncadd [#allocation4], %s2094
      %s2096 = sshll.u32 [#allocation5], 4
      %s2097 = int_to_ptr.vmem [resolvable:$true] %s2096
      %2102 = dma.vmem_to_hbm [thread:$0]  %s2097, 256, %s11, [#allocation4], 128, 128, 8
    $region53: #{pdf_decoder_forward.1} parent=1 // pred_fallthru
      _
    // Predicated region
    $region54: #{pdf_decoder_forward.1} parent=1 // pred_check
      _
    $region55: #{pdf_decoder_forward.1} parent=1 // pred_check_branch
      %2104 = sbr.rel (0) target = $region57
    $region56: #{pdf_decoder_forward.1} parent=1 // pred_region
      _
    $region57: #{pdf_decoder_forward.1} parent=1 // pred_fallthru
      _
    // Predicated region
    $region58: #{pdf_decoder_forward.1} parent=1 // pred_check
      _
    $region59: #{pdf_decoder_forward.1} parent=1 // pred_check_branch
      %2106 = sbr.rel (0) target = $region61
    $region60: #{pdf_decoder_forward.1} parent=1 // pred_region
      %2107 = dma.done [#allocation4], 256
    $region61: #{pdf_decoder_forward.1} parent=1 // pred_fallthru
      _
    // Predicated region
    $region62: #{pdf_decoder_forward.1} parent=1 // pred_check
      _
    $region63: #{pdf_decoder_forward.1} parent=1 // pred_check_branch
      %2109 = sbr.rel (0) target = $region65
    $region64: #{pdf_decoder_forward.1} parent=1 // pred_region
      _
    $region65: #{pdf_decoder_forward.1} parent=1 // pred_fallthru
      _
    %2110 = vsyncpa [#allocation3], 1
    %2111 = vsyncpa [#allocation4], 1

</llo_original>
